<compile_context>
chip_gen: v7x
topology: tpu7x:2x2x1
jax: 0.10.0
libtpu: 0.0.40
codegen_flags: <defaults>
</compile_context>

<pallas_src>
import functools

import jax
import jax.numpy as jnp
import numpy as np
from jax.experimental import pallas as pl
from jax.experimental.pallas import tpu as pltpu

HIDDEN_DIM = 32
INPUT_DIM = 32
NUM_LAYERS = 2
OUTPUT_DIM = 1
SUBLANE = 8


def _lstm_kernel(x_ref,      # [T*Bp, D]  time-major, batch padded to Bp
                 w_ih1_ref,  # [D, 4H]    layer-0 input weights  (cols i,f,o,g)
                 w_hh1_ref,  # [H, 4H]    layer-0 recurrent weights
                 b1_ref,     # [1, 4H]    layer-0 bias (b_ih + b_hh)
                 w_ih2_ref,  # [H, 4H]    layer-1 input weights
                 w_hh2_ref,  # [H, 4H]    layer-1 recurrent weights
                 b2_ref,     # [1, 4H]    layer-1 bias (b_ih + b_hh)
                 w_fc_ref,   # [1, H]     fc weight row
                 b_fc_ref,   # [1, 1]     fc bias
                 out_ref,    # [Bp, OUTPUT_DIM]
                 gx_ref,     # VMEM scratch [T*Bp, 4H]
                 *, seq_len, batch):
    H = HIDDEN_DIM

    # Layer-0 input projection for ALL timesteps in one MXU matmul (no
    # recurrent dependence), bias folded in. Staged into VMEM scratch so the
    # unrolled loop reloads one (8,128) tile per step instead of keeping the
    # whole [T*Bp, 4H] value live as SSA across the unroll (vreg pressure).
    gx_ref[...] = (jnp.dot(x_ref[...], w_ih1_ref[...],
                           preferred_element_type=jnp.float32)
                   + b1_ref[...])

    # Hoist weight loads and the b2 broadcast out of the unrolled loop
    # (JAX does not CSE broadcast_in_dim).
    w_hh1 = w_hh1_ref[...]
    w_ih2 = w_ih2_ref[...]
    w_hh2 = w_hh2_ref[...]
    b2b = jnp.broadcast_to(b2_ref[...], (batch, 4 * H))

    h1 = jnp.zeros((batch, H), jnp.float32)
    c1 = jnp.zeros((batch, H), jnp.float32)
    h2 = jnp.zeros((batch, H), jnp.float32)
    c2 = jnp.zeros((batch, H), jnp.float32)

    def apply_gates(g, c):
        # Gate columns are pre-permuted to (i, f, o, g): sigmoid only over the
        # contiguous [:, :3H] prefix, tanh over the [:, 3H:] suffix. No wasted
        # EUP lanes, no re-doing the g column.
        s = jax.nn.sigmoid(g[:, :3 * H])
        i = s[:, 0 * H:1 * H]
        f = s[:, 1 * H:2 * H]
        o = s[:, 2 * H:3 * H]
        gg = jnp.tanh(g[:, 3 * H:4 * H])
        c_new = f * c + i * gg
        h_new = o * jnp.tanh(c_new)
        return h_new, c_new

    # Fully unrolled serial recurrence (seq_len is small and static).
    for t in range(seq_len):
        # Layer-1 recurrent partial depends ONLY on h2(t-1); issue it first so
        # its MXU push / EUP work overlaps with layer-0 of this step (the old
        # concat([h1,h2]) @ [W_ih2;W_hh2] fully serialized the two layers).
        g2_partial = jnp.dot(h2, w_hh2,
                             preferred_element_type=jnp.float32) + b2b

        # Layer 0: precomputed input gates (tile-aligned row slice) + recurrent.
        g1 = gx_ref[pl.ds(t * batch, batch), :] + jnp.dot(
            h1, w_hh1, preferred_element_type=jnp.float32)
        h1, c1 = apply_gates(g1, c1)

        # Layer 1: add the h1(t)-dependent half.
        g2 = g2_partial + jnp.dot(h1, w_ih2,
                                  preferred_element_type=jnp.float32)
        h2, c2 = apply_gates(g2, c2)

    # FC head: VPU multiply + lane reduction (avoids an N=1 MXU matmul).
    out = jnp.sum(h2 * w_fc_ref[...], axis=-1, keepdims=True) + b_fc_ref[...]
    out_ref[...] = out.astype(out_ref.dtype)


@jax.jit
def lstm_forward(x, kparams):
    """x: [B, T, INPUT_DIM] float32 -> [B, OUTPUT_DIM] float32."""
    B, T, D = x.shape
    (w_ih1, w_hh1, b1, w_ih2, w_hh2, b2, w_fc, b_fc) = kparams

    # Pad batch to a full sublane (8): every per-step slice becomes (8,128)
    # tile aligned and vector ops use all sublanes. Padded rows discarded.
    Bp = max(SUBLANE, ((B + SUBLANE - 1) // SUBLANE) * SUBLANE)
    x_p = jnp.pad(x, ((0, Bp - B), (0, 0), (0, 0)))

    # Time-major, flattened: rows [t*Bp, (t+1)*Bp) hold timestep t.
    x_flat = jnp.transpose(x_p, (1, 0, 2)).reshape(T * Bp, D)

    kernel = functools.partial(_lstm_kernel, seq_len=T, batch=Bp)

    # Single grid-less invocation: all operands are tiny and sit in VMEM as
    # whole-array blocks, so there is no per-timestep pipeline/DMA overhead.
    out = pl.pallas_call(
        kernel,
        out_shape=jax.ShapeDtypeStruct((Bp, OUTPUT_DIM), jnp.float32),
        scratch_shapes=[pltpu.VMEM((T * Bp, 4 * HIDDEN_DIM), jnp.float32)],
    )(x_flat, w_ih1, w_hh1, b1, w_ih2, w_hh2, b2, w_fc, b_fc)
    return out[:B]


def init_torch_params(key):
    """Deterministic init with the exact shapes/layout of nn.LSTM(32,32,2)
    (gate order i,f,g,o along the 4H axis) + nn.Linear(32,1)."""
    H, D = HIDDEN_DIM, INPUT_DIM
    bound = 1.0 / np.sqrt(H)
    ks = jax.random.split(key, 10)
    u = lambda k, shape: jax.random.uniform(k, shape, jnp.float32, -bound, bound)
    return dict(
        w_ih_l0=u(ks[0], (4 * H, D)),
        w_hh_l0=u(ks[1], (4 * H, H)),
        b_ih_l0=u(ks[2], (4 * H,)),
        b_hh_l0=u(ks[3], (4 * H,)),
        w_ih_l1=u(ks[4], (4 * H, H)),
        w_hh_l1=u(ks[5], (4 * H, H)),
        b_ih_l1=u(ks[6], (4 * H,)),
        b_hh_l1=u(ks[7], (4 * H,)),
        w_fc=u(ks[8], (OUTPUT_DIM, H)),
        b_fc=u(ks[9], (OUTPUT_DIM,)),
    )


def prepare_kernel_params(p):
    """PyTorch layout -> kernel layout: transpose to [in, 4H], pre-sum the two
    LSTM biases per layer, and permute the 4H gate axis from (i,f,g,o) to
    (i,f,o,g) so the kernel's sigmoid covers a contiguous prefix."""
    H = HIDDEN_DIM
    perm = jnp.concatenate([jnp.arange(0, 2 * H),
                            jnp.arange(3 * H, 4 * H),
                            jnp.arange(2 * H, 3 * H)])

    def pw(w):                       # [4H, in] -> [in, 4H], gate-permuted
        return jnp.transpose(w[perm])

    def pb(b_ih, b_hh):              # -> [1, 4H], gate-permuted, summed
        return (b_ih + b_hh)[perm][None, :]

    return (pw(p["w_ih_l0"]), pw(p["w_hh_l0"]), pb(p["b_ih_l0"], p["b_hh_l0"]),
            pw(p["w_ih_l1"]), pw(p["w_hh_l1"]), pb(p["b_ih_l1"], p["b_hh_l1"]),
            p["w_fc"], p["b_fc"][None, :])


def lstm_reference(x, p):
    """Pure-JAX reference matching torch.nn.LSTM semantics (i,f,g,o order)."""
    H = HIDDEN_DIM
    B, T, _ = x.shape

    def cell(x_t, h, c, w_ih, w_hh, b_ih, b_hh):
        g = x_t @ w_ih.T + h @ w_hh.T + b_ih + b_hh
        i = jax.nn.sigmoid(g[:, 0 * H:1 * H])
        f = jax.nn.sigmoid(g[:, 1 * H:2 * H])
        gg = jnp.tanh(g[:, 2 * H:3 * H])
        o = jax.nn.sigmoid(g[:, 3 * H:4 * H])
        c_new = f * c + i * gg
        h_new = o * jnp.tanh(c_new)
        return h_new, c_new

    h1 = jnp.zeros((B, H), jnp.float32)
    c1 = jnp.zeros((B, H), jnp.float32)
    h2 = jnp.zeros((B, H), jnp.float32)
    c2 = jnp.zeros((B, H), jnp.float32)
    for t in range(T):
        h1, c1 = cell(x[:, t, :], h1, c1,
                      p["w_ih_l0"], p["w_hh_l0"], p["b_ih_l0"], p["b_hh_l0"])
        h2, c2 = cell(h1, h2, c2,
                      p["w_ih_l1"], p["w_hh_l1"], p["b_ih_l1"], p["b_hh_l1"])
    return h2 @ p["w_fc"].T + p["b_fc"]


if __name__ == "__main__":
    B, T = 2, 8
    key = jax.random.PRNGKey(0)
    k_x, k_p = jax.random.split(key)

    x = jax.random.normal(k_x, (B, T, INPUT_DIM), jnp.float32)
    torch_params = init_torch_params(k_p)
    kernel_params = prepare_kernel_params(torch_params)

    out = lstm_forward(x, kernel_params)
    out = jax.block_until_ready(out)

    ref = lstm_reference(x, torch_params)
    np.testing.assert_allclose(np.asarray(out), np.asarray(ref),
                               rtol=1e-4, atol=1e-4)
    assert out.shape == (B, OUTPUT_DIM)
    print("KERNEL_OK")
</pallas_src>

<mosaic_0001>
module attributes {stable_mosaic.version = 11 : i64} {
  func.func @_lstm_kernel(%arg0: memref<64x32xf32, #tpu.memory_space<vmem>>, %arg1: memref<32x128xf32, #tpu.memory_space<vmem>>, %arg2: memref<32x128xf32, #tpu.memory_space<vmem>>, %arg3: memref<1x128xf32, #tpu.memory_space<vmem>>, %arg4: memref<32x128xf32, #tpu.memory_space<vmem>>, %arg5: memref<32x128xf32, #tpu.memory_space<vmem>>, %arg6: memref<1x128xf32, #tpu.memory_space<vmem>>, %arg7: memref<1x32xf32, #tpu.memory_space<vmem>>, %arg8: memref<1x1xf32, #tpu.memory_space<vmem>>, %arg9: memref<8x1xf32, #tpu.memory_space<vmem>>, %arg10: memref<64x128xf32, #tpu.memory_space<vmem>>) attributes {dimension_semantics = [], scalar_prefetch = 0 : i64, scratch_operands = 1 : i64, tpu.core_type = #tpu.core_type<tc>} {
    %c0 = arith.constant 0 : index
    %c0_0 = arith.constant 0 : index
    %0 = vector.load %arg0[%c0, %c0_0] : memref<64x32xf32, #tpu.memory_space<vmem>>, vector<64x32xf32>
    %c0_1 = arith.constant 0 : index
    %c0_2 = arith.constant 0 : index
    %1 = vector.load %arg1[%c0_1, %c0_2] : memref<32x128xf32, #tpu.memory_space<vmem>>, vector<32x128xf32>
    %cst = arith.constant dense<0.000000e+00> : vector<64x128xf32>
    %2 = tpu.matmul %0, %1, %cst {dimension_numbers = #tpu.dot_dimension_numbers<[1], [0], [0], [1], [0, 0, 1, 1], [], []>} : vector<64x32xf32>, vector<32x128xf32>, vector<64x128xf32> -> vector<64x128xf32>
    %c0_3 = arith.constant 0 : index
    %c0_4 = arith.constant 0 : index
    %3 = vector.load %arg3[%c0_3, %c0_4] : memref<1x128xf32, #tpu.memory_space<vmem>>, vector<1x128xf32>
    %4 = vector.broadcast %3 : vector<1x128xf32> to vector<64x128xf32>
    %5 = arith.addf %2, %4 : vector<64x128xf32>
    %c0_5 = arith.constant 0 : index
    %c0_6 = arith.constant 0 : index
    %6 = vector.load %arg10[%c0_5, %c0_6] : memref<64x128xf32, #tpu.memory_space<vmem>>, vector<64x128xf32>
    tpu.vector_store %arg10[%c0_5, %c0_6], %5 {strides = array<i32>} : memref<64x128xf32, #tpu.memory_space<vmem>>, vector<64x128xf32>,
    %c0_7 = arith.constant 0 : index
    %c0_8 = arith.constant 0 : index
    %7 = vector.load %arg2[%c0_7, %c0_8] : memref<32x128xf32, #tpu.memory_space<vmem>>, vector<32x128xf32>
    %c0_9 = arith.constant 0 : index
    %c0_10 = arith.constant 0 : index
    %8 = vector.load %arg4[%c0_9, %c0_10] : memref<32x128xf32, #tpu.memory_space<vmem>>, vector<32x128xf32>
    %c0_11 = arith.constant 0 : index
    %c0_12 = arith.constant 0 : index
    %9 = vector.load %arg5[%c0_11, %c0_12] : memref<32x128xf32, #tpu.memory_space<vmem>>, vector<32x128xf32>
    %c0_13 = arith.constant 0 : index
    %c0_14 = arith.constant 0 : index
    %10 = vector.load %arg6[%c0_13, %c0_14] : memref<1x128xf32, #tpu.memory_space<vmem>>, vector<1x128xf32>
    %11 = vector.shape_cast %10 : vector<1x128xf32> to vector<1x128xf32>
    %12 = vector.broadcast %11 : vector<1x128xf32> to vector<8x128xf32>
    %cst_15 = arith.constant 0.000000e+00 : f32
    %13 = vector.broadcast %cst_15 : f32 to vector<8x32xf32>
    %cst_16 = arith.constant 0.000000e+00 : f32
    %14 = vector.broadcast %cst_16 : f32 to vector<8x32xf32>
    %cst_17 = arith.constant 0.000000e+00 : f32
    %15 = vector.broadcast %cst_17 : f32 to vector<8x32xf32>
    %cst_18 = arith.constant 0.000000e+00 : f32
    %16 = vector.broadcast %cst_18 : f32 to vector<8x32xf32>
    %cst_19 = arith.constant dense<0.000000e+00> : vector<8x128xf32>
    %17 = tpu.matmul %15, %9, %cst_19 {dimension_numbers = #tpu.dot_dimension_numbers<[1], [0], [0], [1], [0, 0, 1, 1], [], []>} : vector<8x32xf32>, vector<32x128xf32>, vector<8x128xf32> -> vector<8x128xf32>
    %18 = arith.addf %17, %12 : vector<8x128xf32>
    %c0_20 = arith.constant 0 : index
    %c0_21 = arith.constant 0 : index
    %19 = vector.load %arg10[%c0_20, %c0_21] : memref<64x128xf32, #tpu.memory_space<vmem>>, vector<8x128xf32>
    %cst_22 = arith.constant dense<0.000000e+00> : vector<8x128xf32>
    %20 = tpu.matmul %13, %7, %cst_22 {dimension_numbers = #tpu.dot_dimension_numbers<[1], [0], [0], [1], [0, 0, 1, 1], [], []>} : vector<8x32xf32>, vector<32x128xf32>, vector<8x128xf32> -> vector<8x128xf32>
    %21 = arith.addf %19, %20 : vector<8x128xf32>
    %22 = vector.extract_strided_slice %21 {offsets = [0, 0], sizes = [8, 96], strides = [1, 1]} : vector<8x128xf32> to vector<8x96xf32>
    %23 = arith.negf %22 : vector<8x96xf32>
    %24 = math.exp %23 : vector<8x96xf32>
    %cst_23 = arith.constant 1.000000e+00 : f32
    %25 = vector.broadcast %cst_23 : f32 to vector<8x96xf32>
    %26 = arith.addf %25, %24 : vector<8x96xf32>
    %27 = arith.divf %25, %26 : vector<8x96xf32>
    %28 = vector.extract_strided_slice %27 {offsets = [0, 0], sizes = [8, 32], strides = [1, 1]} : vector<8x96xf32> to vector<8x32xf32>
    %29 = vector.extract_strided_slice %27 {offsets = [0, 32], sizes = [8, 32], strides = [1, 1]} : vector<8x96xf32> to vector<8x32xf32>
    %30 = vector.extract_strided_slice %27 {offsets = [0, 64], sizes = [8, 32], strides = [1, 1]} : vector<8x96xf32> to vector<8x32xf32>
    %31 = vector.extract_strided_slice %21 {offsets = [0, 96], sizes = [8, 32], strides = [1, 1]} : vector<8x128xf32> to vector<8x32xf32>
    %32 = math.tanh %31 : vector<8x32xf32>
    %33 = arith.mulf %29, %14 : vector<8x32xf32>
    %34 = arith.mulf %28, %32 : vector<8x32xf32>
    %35 = arith.addf %33, %34 : vector<8x32xf32>
    %36 = math.tanh %35 : vector<8x32xf32>
    %37 = arith.mulf %30, %36 : vector<8x32xf32>
    %cst_24 = arith.constant dense<0.000000e+00> : vector<8x128xf32>
    %38 = tpu.matmul %37, %8, %cst_24 {dimension_numbers = #tpu.dot_dimension_numbers<[1], [0], [0], [1], [0, 0, 1, 1], [], []>} : vector<8x32xf32>, vector<32x128xf32>, vector<8x128xf32> -> vector<8x128xf32>
    %39 = arith.addf %18, %38 : vector<8x128xf32>
    %40 = vector.extract_strided_slice %39 {offsets = [0, 0], sizes = [8, 96], strides = [1, 1]} : vector<8x128xf32> to vector<8x96xf32>
    %41 = arith.negf %40 : vector<8x96xf32>
    %42 = math.exp %41 : vector<8x96xf32>
    %cst_25 = arith.constant 1.000000e+00 : f32
    %43 = vector.broadcast %cst_25 : f32 to vector<8x96xf32>
    %44 = arith.addf %43, %42 : vector<8x96xf32>
    %45 = arith.divf %43, %44 : vector<8x96xf32>
    %46 = vector.extract_strided_slice %45 {offsets = [0, 0], sizes = [8, 32], strides = [1, 1]} : vector<8x96xf32> to vector<8x32xf32>
    %47 = vector.extract_strided_slice %45 {offsets = [0, 32], sizes = [8, 32], strides = [1, 1]} : vector<8x96xf32> to vector<8x32xf32>
    %48 = vector.extract_strided_slice %45 {offsets = [0, 64], sizes = [8, 32], strides = [1, 1]} : vector<8x96xf32> to vector<8x32xf32>
    %49 = vector.extract_strided_slice %39 {offsets = [0, 96], sizes = [8, 32], strides = [1, 1]} : vector<8x128xf32> to vector<8x32xf32>
    %50 = math.tanh %49 : vector<8x32xf32>
    %51 = arith.mulf %47, %16 : vector<8x32xf32>
    %52 = arith.mulf %46, %50 : vector<8x32xf32>
    %53 = arith.addf %51, %52 : vector<8x32xf32>
    %54 = math.tanh %53 : vector<8x32xf32>
    %55 = arith.mulf %48, %54 : vector<8x32xf32>
    %cst_26 = arith.constant dense<0.000000e+00> : vector<8x128xf32>
    %56 = tpu.matmul %55, %9, %cst_26 {dimension_numbers = #tpu.dot_dimension_numbers<[1], [0], [0], [1], [0, 0, 1, 1], [], []>} : vector<8x32xf32>, vector<32x128xf32>, vector<8x128xf32> -> vector<8x128xf32>
    %57 = arith.addf %56, %12 : vector<8x128xf32>
    %c8 = arith.constant 8 : index
    %c0_27 = arith.constant 0 : index
    %58 = vector.load %arg10[%c8, %c0_27] : memref<64x128xf32, #tpu.memory_space<vmem>>, vector<8x128xf32>
    %cst_28 = arith.constant dense<0.000000e+00> : vector<8x128xf32>
    %59 = tpu.matmul %37, %7, %cst_28 {dimension_numbers = #tpu.dot_dimension_numbers<[1], [0], [0], [1], [0, 0, 1, 1], [], []>} : vector<8x32xf32>, vector<32x128xf32>, vector<8x128xf32> -> vector<8x128xf32>
    %60 = arith.addf %58, %59 : vector<8x128xf32>
    %61 = vector.extract_strided_slice %60 {offsets = [0, 0], sizes = [8, 96], strides = [1, 1]} : vector<8x128xf32> to vector<8x96xf32>
    %62 = arith.negf %61 : vector<8x96xf32>
    %63 = math.exp %62 : vector<8x96xf32>
    %cst_29 = arith.constant 1.000000e+00 : f32
    %64 = vector.broadcast %cst_29 : f32 to vector<8x96xf32>
    %65 = arith.addf %64, %63 : vector<8x96xf32>
    %66 = arith.divf %64, %65 : vector<8x96xf32>
    %67 = vector.extract_strided_slice %66 {offsets = [0, 0], sizes = [8, 32], strides = [1, 1]} : vector<8x96xf32> to vector<8x32xf32>
    %68 = vector.extract_strided_slice %66 {offsets = [0, 32], sizes = [8, 32], strides = [1, 1]} : vector<8x96xf32> to vector<8x32xf32>
    %69 = vector.extract_strided_slice %66 {offsets = [0, 64], sizes = [8, 32], strides = [1, 1]} : vector<8x96xf32> to vector<8x32xf32>
    %70 = vector.extract_strided_slice %60 {offsets = [0, 96], sizes = [8, 32], strides = [1, 1]} : vector<8x128xf32> to vector<8x32xf32>
    %71 = math.tanh %70 : vector<8x32xf32>
    %72 = arith.mulf %68, %35 : vector<8x32xf32>
    %73 = arith.mulf %67, %71 : vector<8x32xf32>
    %74 = arith.addf %72, %73 : vector<8x32xf32>
    %75 = math.tanh %74 : vector<8x32xf32>
    %76 = arith.mulf %69, %75 : vector<8x32xf32>
    %cst_30 = arith.constant dense<0.000000e+00> : vector<8x128xf32>
    %77 = tpu.matmul %76, %8, %cst_30 {dimension_numbers = #tpu.dot_dimension_numbers<[1], [0], [0], [1], [0, 0, 1, 1], [], []>} : vector<8x32xf32>, vector<32x128xf32>, vector<8x128xf32> -> vector<8x128xf32>
    %78 = arith.addf %57, %77 : vector<8x128xf32>
    %79 = vector.extract_strided_slice %78 {offsets = [0, 0], sizes = [8, 96], strides = [1, 1]} : vector<8x128xf32> to vector<8x96xf32>
    %80 = arith.negf %79 : vector<8x96xf32>
    %81 = math.exp %80 : vector<8x96xf32>
    %cst_31 = arith.constant 1.000000e+00 : f32
    %82 = vector.broadcast %cst_31 : f32 to vector<8x96xf32>
    %83 = arith.addf %82, %81 : vector<8x96xf32>
    %84 = arith.divf %82, %83 : vector<8x96xf32>
    %85 = vector.extract_strided_slice %84 {offsets = [0, 0], sizes = [8, 32], strides = [1, 1]} : vector<8x96xf32> to vector<8x32xf32>
    %86 = vector.extract_strided_slice %84 {offsets = [0, 32], sizes = [8, 32], strides = [1, 1]} : vector<8x96xf32> to vector<8x32xf32>
    %87 = vector.extract_strided_slice %84 {offsets = [0, 64], sizes = [8, 32], strides = [1, 1]} : vector<8x96xf32> to vector<8x32xf32>
    %88 = vector.extract_strided_slice %78 {offsets = [0, 96], sizes = [8, 32], strides = [1, 1]} : vector<8x128xf32> to vector<8x32xf32>
    %89 = math.tanh %88 : vector<8x32xf32>
    %90 = arith.mulf %86, %53 : vector<8x32xf32>
    %91 = arith.mulf %85, %89 : vector<8x32xf32>
    %92 = arith.addf %90, %91 : vector<8x32xf32>
    %93 = math.tanh %92 : vector<8x32xf32>
    %94 = arith.mulf %87, %93 : vector<8x32xf32>
    %cst_32 = arith.constant dense<0.000000e+00> : vector<8x128xf32>
    %95 = tpu.matmul %94, %9, %cst_32 {dimension_numbers = #tpu.dot_dimension_numbers<[1], [0], [0], [1], [0, 0, 1, 1], [], []>} : vector<8x32xf32>, vector<32x128xf32>, vector<8x128xf32> -> vector<8x128xf32>
    %96 = arith.addf %95, %12 : vector<8x128xf32>
    %c16 = arith.constant 16 : index
    %c0_33 = arith.constant 0 : index
    %97 = vector.load %arg10[%c16, %c0_33] : memref<64x128xf32, #tpu.memory_space<vmem>>, vector<8x128xf32>
    %cst_34 = arith.constant dense<0.000000e+00> : vector<8x128xf32>
    %98 = tpu.matmul %76, %7, %cst_34 {dimension_numbers = #tpu.dot_dimension_numbers<[1], [0], [0], [1], [0, 0, 1, 1], [], []>} : vector<8x32xf32>, vector<32x128xf32>, vector<8x128xf32> -> vector<8x128xf32>
    %99 = arith.addf %97, %98 : vector<8x128xf32>
    %100 = vector.extract_strided_slice %99 {offsets = [0, 0], sizes = [8, 96], strides = [1, 1]} : vector<8x128xf32> to vector<8x96xf32>
    %101 = arith.negf %100 : vector<8x96xf32>
    %102 = math.exp %101 : vector<8x96xf32>
    %cst_35 = arith.constant 1.000000e+00 : f32
    %103 = vector.broadcast %cst_35 : f32 to vector<8x96xf32>
    %104 = arith.addf %103, %102 : vector<8x96xf32>
    %105 = arith.divf %103, %104 : vector<8x96xf32>
    %106 = vector.extract_strided_slice %105 {offsets = [0, 0], sizes = [8, 32], strides = [1, 1]} : vector<8x96xf32> to vector<8x32xf32>
    %107 = vector.extract_strided_slice %105 {offsets = [0, 32], sizes = [8, 32], strides = [1, 1]} : vector<8x96xf32> to vector<8x32xf32>
    %108 = vector.extract_strided_slice %105 {offsets = [0, 64], sizes = [8, 32], strides = [1, 1]} : vector<8x96xf32> to vector<8x32xf32>
    %109 = vector.extract_strided_slice %99 {offsets = [0, 96], sizes = [8, 32], strides = [1, 1]} : vector<8x128xf32> to vector<8x32xf32>
    %110 = math.tanh %109 : vector<8x32xf32>
    %111 = arith.mulf %107, %74 : vector<8x32xf32>
    %112 = arith.mulf %106, %110 : vector<8x32xf32>
    %113 = arith.addf %111, %112 : vector<8x32xf32>
    %114 = math.tanh %113 : vector<8x32xf32>
    %115 = arith.mulf %108, %114 : vector<8x32xf32>
    %cst_36 = arith.constant dense<0.000000e+00> : vector<8x128xf32>
    %116 = tpu.matmul %115, %8, %cst_36 {dimension_numbers = #tpu.dot_dimension_numbers<[1], [0], [0], [1], [0, 0, 1, 1], [], []>} : vector<8x32xf32>, vector<32x128xf32>, vector<8x128xf32> -> vector<8x128xf32>
    %117 = arith.addf %96, %116 : vector<8x128xf32>
    %118 = vector.extract_strided_slice %117 {offsets = [0, 0], sizes = [8, 96], strides = [1, 1]} : vector<8x128xf32> to vector<8x96xf32>
    %119 = arith.negf %118 : vector<8x96xf32>
    %120 = math.exp %119 : vector<8x96xf32>
    %cst_37 = arith.constant 1.000000e+00 : f32
    %121 = vector.broadcast %cst_37 : f32 to vector<8x96xf32>
    %122 = arith.addf %121, %120 : vector<8x96xf32>
    %123 = arith.divf %121, %122 : vector<8x96xf32>
    %124 = vector.extract_strided_slice %123 {offsets = [0, 0], sizes = [8, 32], strides = [1, 1]} : vector<8x96xf32> to vector<8x32xf32>
    %125 = vector.extract_strided_slice %123 {offsets = [0, 32], sizes = [8, 32], strides = [1, 1]} : vector<8x96xf32> to vector<8x32xf32>
    %126 = vector.extract_strided_slice %123 {offsets = [0, 64], sizes = [8, 32], strides = [1, 1]} : vector<8x96xf32> to vector<8x32xf32>
    %127 = vector.extract_strided_slice %117 {offsets = [0, 96], sizes = [8, 32], strides = [1, 1]} : vector<8x128xf32> to vector<8x32xf32>
    %128 = math.tanh %127 : vector<8x32xf32>
    %129 = arith.mulf %125, %92 : vector<8x32xf32>
    %130 = arith.mulf %124, %128 : vector<8x32xf32>
    %131 = arith.addf %129, %130 : vector<8x32xf32>
    %132 = math.tanh %131 : vector<8x32xf32>
    %133 = arith.mulf %126, %132 : vector<8x32xf32>
    %cst_38 = arith.constant dense<0.000000e+00> : vector<8x128xf32>
    %134 = tpu.matmul %133, %9, %cst_38 {dimension_numbers = #tpu.dot_dimension_numbers<[1], [0], [0], [1], [0, 0, 1, 1], [], []>} : vector<8x32xf32>, vector<32x128xf32>, vector<8x128xf32> -> vector<8x128xf32>
    %135 = arith.addf %134, %12 : vector<8x128xf32>
    %c24 = arith.constant 24 : index
    %c0_39 = arith.constant 0 : index
    %136 = vector.load %arg10[%c24, %c0_39] : memref<64x128xf32, #tpu.memory_space<vmem>>, vector<8x128xf32>
    %cst_40 = arith.constant dense<0.000000e+00> : vector<8x128xf32>
    %137 = tpu.matmul %115, %7, %cst_40 {dimension_numbers = #tpu.dot_dimension_numbers<[1], [0], [0], [1], [0, 0, 1, 1], [], []>} : vector<8x32xf32>, vector<32x128xf32>, vector<8x128xf32> -> vector<8x128xf32>
    %138 = arith.addf %136, %137 : vector<8x128xf32>
    %139 = vector.extract_strided_slice %138 {offsets = [0, 0], sizes = [8, 96], strides = [1, 1]} : vector<8x128xf32> to vector<8x96xf32>
    %140 = arith.negf %139 : vector<8x96xf32>
    %141 = math.exp %140 : vector<8x96xf32>
    %cst_41 = arith.constant 1.000000e+00 : f32
    %142 = vector.broadcast %cst_41 : f32 to vector<8x96xf32>
    %143 = arith.addf %142, %141 : vector<8x96xf32>
    %144 = arith.divf %142, %143 : vector<8x96xf32>
    %145 = vector.extract_strided_slice %144 {offsets = [0, 0], sizes = [8, 32], strides = [1, 1]} : vector<8x96xf32> to vector<8x32xf32>
    %146 = vector.extract_strided_slice %144 {offsets = [0, 32], sizes = [8, 32], strides = [1, 1]} : vector<8x96xf32> to vector<8x32xf32>
    %147 = vector.extract_strided_slice %144 {offsets = [0, 64], sizes = [8, 32], strides = [1, 1]} : vector<8x96xf32> to vector<8x32xf32>
    %148 = vector.extract_strided_slice %138 {offsets = [0, 96], sizes = [8, 32], strides = [1, 1]} : vector<8x128xf32> to vector<8x32xf32>
    %149 = math.tanh %148 : vector<8x32xf32>
    %150 = arith.mulf %146, %113 : vector<8x32xf32>
    %151 = arith.mulf %145, %149 : vector<8x32xf32>
    %152 = arith.addf %150, %151 : vector<8x32xf32>
    %153 = math.tanh %152 : vector<8x32xf32>
    %154 = arith.mulf %147, %153 : vector<8x32xf32>
    %cst_42 = arith.constant dense<0.000000e+00> : vector<8x128xf32>
    %155 = tpu.matmul %154, %8, %cst_42 {dimension_numbers = #tpu.dot_dimension_numbers<[1], [0], [0], [1], [0, 0, 1, 1], [], []>} : vector<8x32xf32>, vector<32x128xf32>, vector<8x128xf32> -> vector<8x128xf32>
    %156 = arith.addf %135, %155 : vector<8x128xf32>
    %157 = vector.extract_strided_slice %156 {offsets = [0, 0], sizes = [8, 96], strides = [1, 1]} : vector<8x128xf32> to vector<8x96xf32>
    %158 = arith.negf %157 : vector<8x96xf32>
    %159 = math.exp %158 : vector<8x96xf32>
    %cst_43 = arith.constant 1.000000e+00 : f32
    %160 = vector.broadcast %cst_43 : f32 to vector<8x96xf32>
    %161 = arith.addf %160, %159 : vector<8x96xf32>
    %162 = arith.divf %160, %161 : vector<8x96xf32>
    %163 = vector.extract_strided_slice %162 {offsets = [0, 0], sizes = [8, 32], strides = [1, 1]} : vector<8x96xf32> to vector<8x32xf32>
    %164 = vector.extract_strided_slice %162 {offsets = [0, 32], sizes = [8, 32], strides = [1, 1]} : vector<8x96xf32> to vector<8x32xf32>
    %165 = vector.extract_strided_slice %162 {offsets = [0, 64], sizes = [8, 32], strides = [1, 1]} : vector<8x96xf32> to vector<8x32xf32>
    %166 = vector.extract_strided_slice %156 {offsets = [0, 96], sizes = [8, 32], strides = [1, 1]} : vector<8x128xf32> to vector<8x32xf32>
    %167 = math.tanh %166 : vector<8x32xf32>
    %168 = arith.mulf %164, %131 : vector<8x32xf32>
    %169 = arith.mulf %163, %167 : vector<8x32xf32>
    %170 = arith.addf %168, %169 : vector<8x32xf32>
    %171 = math.tanh %170 : vector<8x32xf32>
    %172 = arith.mulf %165, %171 : vector<8x32xf32>
    %cst_44 = arith.constant dense<0.000000e+00> : vector<8x128xf32>
    %173 = tpu.matmul %172, %9, %cst_44 {dimension_numbers = #tpu.dot_dimension_numbers<[1], [0], [0], [1], [0, 0, 1, 1], [], []>} : vector<8x32xf32>, vector<32x128xf32>, vector<8x128xf32> -> vector<8x128xf32>
    %174 = arith.addf %173, %12 : vector<8x128xf32>
    %c32 = arith.constant 32 : index
    %c0_45 = arith.constant 0 : index
    %175 = vector.load %arg10[%c32, %c0_45] : memref<64x128xf32, #tpu.memory_space<vmem>>, vector<8x128xf32>
    %cst_46 = arith.constant dense<0.000000e+00> : vector<8x128xf32>
    %176 = tpu.matmul %154, %7, %cst_46 {dimension_numbers = #tpu.dot_dimension_numbers<[1], [0], [0], [1], [0, 0, 1, 1], [], []>} : vector<8x32xf32>, vector<32x128xf32>, vector<8x128xf32> -> vector<8x128xf32>
    %177 = arith.addf %175, %176 : vector<8x128xf32>
    %178 = vector.extract_strided_slice %177 {offsets = [0, 0], sizes = [8, 96], strides = [1, 1]} : vector<8x128xf32> to vector<8x96xf32>
    %179 = arith.negf %178 : vector<8x96xf32>
    %180 = math.exp %179 : vector<8x96xf32>
    %cst_47 = arith.constant 1.000000e+00 : f32
    %181 = vector.broadcast %cst_47 : f32 to vector<8x96xf32>
    %182 = arith.addf %181, %180 : vector<8x96xf32>
    %183 = arith.divf %181, %182 : vector<8x96xf32>
    %184 = vector.extract_strided_slice %183 {offsets = [0, 0], sizes = [8, 32], strides = [1, 1]} : vector<8x96xf32> to vector<8x32xf32>
    %185 = vector.extract_strided_slice %183 {offsets = [0, 32], sizes = [8, 32], strides = [1, 1]} : vector<8x96xf32> to vector<8x32xf32>
    %186 = vector.extract_strided_slice %183 {offsets = [0, 64], sizes = [8, 32], strides = [1, 1]} : vector<8x96xf32> to vector<8x32xf32>
    %187 = vector.extract_strided_slice %177 {offsets = [0, 96], sizes = [8, 32], strides = [1, 1]} : vector<8x128xf32> to vector<8x32xf32>
    %188 = math.tanh %187 : vector<8x32xf32>
    %189 = arith.mulf %185, %152 : vector<8x32xf32>
    %190 = arith.mulf %184, %188 : vector<8x32xf32>
    %191 = arith.addf %189, %190 : vector<8x32xf32>
    %192 = math.tanh %191 : vector<8x32xf32>
    %193 = arith.mulf %186, %192 : vector<8x32xf32>
    %cst_48 = arith.constant dense<0.000000e+00> : vector<8x128xf32>
    %194 = tpu.matmul %193, %8, %cst_48 {dimension_numbers = #tpu.dot_dimension_numbers<[1], [0], [0], [1], [0, 0, 1, 1], [], []>} : vector<8x32xf32>, vector<32x128xf32>, vector<8x128xf32> -> vector<8x128xf32>
    %195 = arith.addf %174, %194 : vector<8x128xf32>
    %196 = vector.extract_strided_slice %195 {offsets = [0, 0], sizes = [8, 96], strides = [1, 1]} : vector<8x128xf32> to vector<8x96xf32>
    %197 = arith.negf %196 : vector<8x96xf32>
    %198 = math.exp %197 : vector<8x96xf32>
    %cst_49 = arith.constant 1.000000e+00 : f32
    %199 = vector.broadcast %cst_49 : f32 to vector<8x96xf32>
    %200 = arith.addf %199, %198 : vector<8x96xf32>
    %201 = arith.divf %199, %200 : vector<8x96xf32>
    %202 = vector.extract_strided_slice %201 {offsets = [0, 0], sizes = [8, 32], strides = [1, 1]} : vector<8x96xf32> to vector<8x32xf32>
    %203 = vector.extract_strided_slice %201 {offsets = [0, 32], sizes = [8, 32], strides = [1, 1]} : vector<8x96xf32> to vector<8x32xf32>
    %204 = vector.extract_strided_slice %201 {offsets = [0, 64], sizes = [8, 32], strides = [1, 1]} : vector<8x96xf32> to vector<8x32xf32>
    %205 = vector.extract_strided_slice %195 {offsets = [0, 96], sizes = [8, 32], strides = [1, 1]} : vector<8x128xf32> to vector<8x32xf32>
    %206 = math.tanh %205 : vector<8x32xf32>
    %207 = arith.mulf %203, %170 : vector<8x32xf32>
    %208 = arith.mulf %202, %206 : vector<8x32xf32>
    %209 = arith.addf %207, %208 : vector<8x32xf32>
    %210 = math.tanh %209 : vector<8x32xf32>
    %211 = arith.mulf %204, %210 : vector<8x32xf32>
    %cst_50 = arith.constant dense<0.000000e+00> : vector<8x128xf32>
    %212 = tpu.matmul %211, %9, %cst_50 {dimension_numbers = #tpu.dot_dimension_numbers<[1], [0], [0], [1], [0, 0, 1, 1], [], []>} : vector<8x32xf32>, vector<32x128xf32>, vector<8x128xf32> -> vector<8x128xf32>
    %213 = arith.addf %212, %12 : vector<8x128xf32>
    %c40 = arith.constant 40 : index
    %c0_51 = arith.constant 0 : index
    %214 = vector.load %arg10[%c40, %c0_51] : memref<64x128xf32, #tpu.memory_space<vmem>>, vector<8x128xf32>
    %cst_52 = arith.constant dense<0.000000e+00> : vector<8x128xf32>
    %215 = tpu.matmul %193, %7, %cst_52 {dimension_numbers = #tpu.dot_dimension_numbers<[1], [0], [0], [1], [0, 0, 1, 1], [], []>} : vector<8x32xf32>, vector<32x128xf32>, vector<8x128xf32> -> vector<8x128xf32>
    %216 = arith.addf %214, %215 : vector<8x128xf32>
    %217 = vector.extract_strided_slice %216 {offsets = [0, 0], sizes = [8, 96], strides = [1, 1]} : vector<8x128xf32> to vector<8x96xf32>
    %218 = arith.negf %217 : vector<8x96xf32>
    %219 = math.exp %218 : vector<8x96xf32>
    %cst_53 = arith.constant 1.000000e+00 : f32
    %220 = vector.broadcast %cst_53 : f32 to vector<8x96xf32>
    %221 = arith.addf %220, %219 : vector<8x96xf32>
    %222 = arith.divf %220, %221 : vector<8x96xf32>
    %223 = vector.extract_strided_slice %222 {offsets = [0, 0], sizes = [8, 32], strides = [1, 1]} : vector<8x96xf32> to vector<8x32xf32>
    %224 = vector.extract_strided_slice %222 {offsets = [0, 32], sizes = [8, 32], strides = [1, 1]} : vector<8x96xf32> to vector<8x32xf32>
    %225 = vector.extract_strided_slice %222 {offsets = [0, 64], sizes = [8, 32], strides = [1, 1]} : vector<8x96xf32> to vector<8x32xf32>
    %226 = vector.extract_strided_slice %216 {offsets = [0, 96], sizes = [8, 32], strides = [1, 1]} : vector<8x128xf32> to vector<8x32xf32>
    %227 = math.tanh %226 : vector<8x32xf32>
    %228 = arith.mulf %224, %191 : vector<8x32xf32>
    %229 = arith.mulf %223, %227 : vector<8x32xf32>
    %230 = arith.addf %228, %229 : vector<8x32xf32>
    %231 = math.tanh %230 : vector<8x32xf32>
    %232 = arith.mulf %225, %231 : vector<8x32xf32>
    %cst_54 = arith.constant dense<0.000000e+00> : vector<8x128xf32>
    %233 = tpu.matmul %232, %8, %cst_54 {dimension_numbers = #tpu.dot_dimension_numbers<[1], [0], [0], [1], [0, 0, 1, 1], [], []>} : vector<8x32xf32>, vector<32x128xf32>, vector<8x128xf32> -> vector<8x128xf32>
    %234 = arith.addf %213, %233 : vector<8x128xf32>
    %235 = vector.extract_strided_slice %234 {offsets = [0, 0], sizes = [8, 96], strides = [1, 1]} : vector<8x128xf32> to vector<8x96xf32>
    %236 = arith.negf %235 : vector<8x96xf32>
    %237 = math.exp %236 : vector<8x96xf32>
    %cst_55 = arith.constant 1.000000e+00 : f32
    %238 = vector.broadcast %cst_55 : f32 to vector<8x96xf32>
    %239 = arith.addf %238, %237 : vector<8x96xf32>
    %240 = arith.divf %238, %239 : vector<8x96xf32>
    %241 = vector.extract_strided_slice %240 {offsets = [0, 0], sizes = [8, 32], strides = [1, 1]} : vector<8x96xf32> to vector<8x32xf32>
    %242 = vector.extract_strided_slice %240 {offsets = [0, 32], sizes = [8, 32], strides = [1, 1]} : vector<8x96xf32> to vector<8x32xf32>
    %243 = vector.extract_strided_slice %240 {offsets = [0, 64], sizes = [8, 32], strides = [1, 1]} : vector<8x96xf32> to vector<8x32xf32>
    %244 = vector.extract_strided_slice %234 {offsets = [0, 96], sizes = [8, 32], strides = [1, 1]} : vector<8x128xf32> to vector<8x32xf32>
    %245 = math.tanh %244 : vector<8x32xf32>
    %246 = arith.mulf %242, %209 : vector<8x32xf32>
    %247 = arith.mulf %241, %245 : vector<8x32xf32>
    %248 = arith.addf %246, %247 : vector<8x32xf32>
    %249 = math.tanh %248 : vector<8x32xf32>
    %250 = arith.mulf %243, %249 : vector<8x32xf32>
    %cst_56 = arith.constant dense<0.000000e+00> : vector<8x128xf32>
    %251 = tpu.matmul %250, %9, %cst_56 {dimension_numbers = #tpu.dot_dimension_numbers<[1], [0], [0], [1], [0, 0, 1, 1], [], []>} : vector<8x32xf32>, vector<32x128xf32>, vector<8x128xf32> -> vector<8x128xf32>
    %252 = arith.addf %251, %12 : vector<8x128xf32>
    %c48 = arith.constant 48 : index
    %c0_57 = arith.constant 0 : index
    %253 = vector.load %arg10[%c48, %c0_57] : memref<64x128xf32, #tpu.memory_space<vmem>>, vector<8x128xf32>
    %cst_58 = arith.constant dense<0.000000e+00> : vector<8x128xf32>
    %254 = tpu.matmul %232, %7, %cst_58 {dimension_numbers = #tpu.dot_dimension_numbers<[1], [0], [0], [1], [0, 0, 1, 1], [], []>} : vector<8x32xf32>, vector<32x128xf32>, vector<8x128xf32> -> vector<8x128xf32>
    %255 = arith.addf %253, %254 : vector<8x128xf32>
    %256 = vector.extract_strided_slice %255 {offsets = [0, 0], sizes = [8, 96], strides = [1, 1]} : vector<8x128xf32> to vector<8x96xf32>
    %257 = arith.negf %256 : vector<8x96xf32>
    %258 = math.exp %257 : vector<8x96xf32>
    %cst_59 = arith.constant 1.000000e+00 : f32
    %259 = vector.broadcast %cst_59 : f32 to vector<8x96xf32>
    %260 = arith.addf %259, %258 : vector<8x96xf32>
    %261 = arith.divf %259, %260 : vector<8x96xf32>
    %262 = vector.extract_strided_slice %261 {offsets = [0, 0], sizes = [8, 32], strides = [1, 1]} : vector<8x96xf32> to vector<8x32xf32>
    %263 = vector.extract_strided_slice %261 {offsets = [0, 32], sizes = [8, 32], strides = [1, 1]} : vector<8x96xf32> to vector<8x32xf32>
    %264 = vector.extract_strided_slice %261 {offsets = [0, 64], sizes = [8, 32], strides = [1, 1]} : vector<8x96xf32> to vector<8x32xf32>
    %265 = vector.extract_strided_slice %255 {offsets = [0, 96], sizes = [8, 32], strides = [1, 1]} : vector<8x128xf32> to vector<8x32xf32>
    %266 = math.tanh %265 : vector<8x32xf32>
    %267 = arith.mulf %263, %230 : vector<8x32xf32>
    %268 = arith.mulf %262, %266 : vector<8x32xf32>
    %269 = arith.addf %267, %268 : vector<8x32xf32>
    %270 = math.tanh %269 : vector<8x32xf32>
    %271 = arith.mulf %264, %270 : vector<8x32xf32>
    %cst_60 = arith.constant dense<0.000000e+00> : vector<8x128xf32>
    %272 = tpu.matmul %271, %8, %cst_60 {dimension_numbers = #tpu.dot_dimension_numbers<[1], [0], [0], [1], [0, 0, 1, 1], [], []>} : vector<8x32xf32>, vector<32x128xf32>, vector<8x128xf32> -> vector<8x128xf32>
    %273 = arith.addf %252, %272 : vector<8x128xf32>
    %274 = vector.extract_strided_slice %273 {offsets = [0, 0], sizes = [8, 96], strides = [1, 1]} : vector<8x128xf32> to vector<8x96xf32>
    %275 = arith.negf %274 : vector<8x96xf32>
    %276 = math.exp %275 : vector<8x96xf32>
    %cst_61 = arith.constant 1.000000e+00 : f32
    %277 = vector.broadcast %cst_61 : f32 to vector<8x96xf32>
    %278 = arith.addf %277, %276 : vector<8x96xf32>
    %279 = arith.divf %277, %278 : vector<8x96xf32>
    %280 = vector.extract_strided_slice %279 {offsets = [0, 0], sizes = [8, 32], strides = [1, 1]} : vector<8x96xf32> to vector<8x32xf32>
    %281 = vector.extract_strided_slice %279 {offsets = [0, 32], sizes = [8, 32], strides = [1, 1]} : vector<8x96xf32> to vector<8x32xf32>
    %282 = vector.extract_strided_slice %279 {offsets = [0, 64], sizes = [8, 32], strides = [1, 1]} : vector<8x96xf32> to vector<8x32xf32>
    %283 = vector.extract_strided_slice %273 {offsets = [0, 96], sizes = [8, 32], strides = [1, 1]} : vector<8x128xf32> to vector<8x32xf32>
    %284 = math.tanh %283 : vector<8x32xf32>
    %285 = arith.mulf %281, %248 : vector<8x32xf32>
    %286 = arith.mulf %280, %284 : vector<8x32xf32>
    %287 = arith.addf %285, %286 : vector<8x32xf32>
    %288 = math.tanh %287 : vector<8x32xf32>
    %289 = arith.mulf %282, %288 : vector<8x32xf32>
    %cst_62 = arith.constant dense<0.000000e+00> : vector<8x128xf32>
    %290 = tpu.matmul %289, %9, %cst_62 {dimension_numbers = #tpu.dot_dimension_numbers<[1], [0], [0], [1], [0, 0, 1, 1], [], []>} : vector<8x32xf32>, vector<32x128xf32>, vector<8x128xf32> -> vector<8x128xf32>
    %291 = arith.addf %290, %12 : vector<8x128xf32>
    %c56 = arith.constant 56 : index
    %c0_63 = arith.constant 0 : index
    %292 = vector.load %arg10[%c56, %c0_63] : memref<64x128xf32, #tpu.memory_space<vmem>>, vector<8x128xf32>
    %cst_64 = arith.constant dense<0.000000e+00> : vector<8x128xf32>
    %293 = tpu.matmul %271, %7, %cst_64 {dimension_numbers = #tpu.dot_dimension_numbers<[1], [0], [0], [1], [0, 0, 1, 1], [], []>} : vector<8x32xf32>, vector<32x128xf32>, vector<8x128xf32> -> vector<8x128xf32>
    %294 = arith.addf %292, %293 : vector<8x128xf32>
    %295 = vector.extract_strided_slice %294 {offsets = [0, 0], sizes = [8, 96], strides = [1, 1]} : vector<8x128xf32> to vector<8x96xf32>
    %296 = arith.negf %295 : vector<8x96xf32>
    %297 = math.exp %296 : vector<8x96xf32>
    %cst_65 = arith.constant 1.000000e+00 : f32
    %298 = vector.broadcast %cst_65 : f32 to vector<8x96xf32>
    %299 = arith.addf %298, %297 : vector<8x96xf32>
    %300 = arith.divf %298, %299 : vector<8x96xf32>
    %301 = vector.extract_strided_slice %300 {offsets = [0, 0], sizes = [8, 32], strides = [1, 1]} : vector<8x96xf32> to vector<8x32xf32>
    %302 = vector.extract_strided_slice %300 {offsets = [0, 32], sizes = [8, 32], strides = [1, 1]} : vector<8x96xf32> to vector<8x32xf32>
    %303 = vector.extract_strided_slice %300 {offsets = [0, 64], sizes = [8, 32], strides = [1, 1]} : vector<8x96xf32> to vector<8x32xf32>
    %304 = vector.extract_strided_slice %294 {offsets = [0, 96], sizes = [8, 32], strides = [1, 1]} : vector<8x128xf32> to vector<8x32xf32>
    %305 = math.tanh %304 : vector<8x32xf32>
    %306 = arith.mulf %302, %269 : vector<8x32xf32>
    %307 = arith.mulf %301, %305 : vector<8x32xf32>
    %308 = arith.addf %306, %307 : vector<8x32xf32>
    %309 = math.tanh %308 : vector<8x32xf32>
    %310 = arith.mulf %303, %309 : vector<8x32xf32>
    %cst_66 = arith.constant dense<0.000000e+00> : vector<8x128xf32>
    %311 = tpu.matmul %310, %8, %cst_66 {dimension_numbers = #tpu.dot_dimension_numbers<[1], [0], [0], [1], [0, 0, 1, 1], [], []>} : vector<8x32xf32>, vector<32x128xf32>, vector<8x128xf32> -> vector<8x128xf32>
    %312 = arith.addf %291, %311 : vector<8x128xf32>
    %313 = vector.extract_strided_slice %312 {offsets = [0, 0], sizes = [8, 96], strides = [1, 1]} : vector<8x128xf32> to vector<8x96xf32>
    %314 = arith.negf %313 : vector<8x96xf32>
    %315 = math.exp %314 : vector<8x96xf32>
    %cst_67 = arith.constant 1.000000e+00 : f32
    %316 = vector.broadcast %cst_67 : f32 to vector<8x96xf32>
    %317 = arith.addf %316, %315 : vector<8x96xf32>
    %318 = arith.divf %316, %317 : vector<8x96xf32>
    %319 = vector.extract_strided_slice %318 {offsets = [0, 0], sizes = [8, 32], strides = [1, 1]} : vector<8x96xf32> to vector<8x32xf32>
    %320 = vector.extract_strided_slice %318 {offsets = [0, 32], sizes = [8, 32], strides = [1, 1]} : vector<8x96xf32> to vector<8x32xf32>
    %321 = vector.extract_strided_slice %318 {offsets = [0, 64], sizes = [8, 32], strides = [1, 1]} : vector<8x96xf32> to vector<8x32xf32>
    %322 = vector.extract_strided_slice %312 {offsets = [0, 96], sizes = [8, 32], strides = [1, 1]} : vector<8x128xf32> to vector<8x32xf32>
    %323 = math.tanh %322 : vector<8x32xf32>
    %324 = arith.mulf %320, %287 : vector<8x32xf32>
    %325 = arith.mulf %319, %323 : vector<8x32xf32>
    %326 = arith.addf %324, %325 : vector<8x32xf32>
    %327 = math.tanh %326 : vector<8x32xf32>
    %328 = arith.mulf %321, %327 : vector<8x32xf32>
    %c0_68 = arith.constant 0 : index
    %c0_69 = arith.constant 0 : index
    %329 = vector.load %arg7[%c0_68, %c0_69] : memref<1x32xf32, #tpu.memory_space<vmem>>, vector<1x32xf32>
    %330 = vector.broadcast %329 : vector<1x32xf32> to vector<8x32xf32>
    %331 = arith.mulf %328, %330 : vector<8x32xf32>
    %cst_70 = arith.constant dense<0.000000e+00> : vector<8xf32>
    %332 = vector.multi_reduction <add>, %331, %cst_70 [1] : vector<8x32xf32> to vector<8xf32>
    %333 = vector.shape_cast %332 : vector<8xf32> to vector<8x1xf32>
    %c0_71 = arith.constant 0 : index
    %c0_72 = arith.constant 0 : index
    %334 = vector.load %arg8[%c0_71, %c0_72] : memref<1x1xf32, #tpu.memory_space<vmem>>, vector<1x1xf32>
    %335 = vector.broadcast %334 : vector<1x1xf32> to vector<8x1xf32>
    %336 = arith.addf %333, %335 : vector<8x1xf32>
    %c0_73 = arith.constant 0 : index
    %c0_74 = arith.constant 0 : index
    %337 = vector.load %arg9[%c0_73, %c0_74] : memref<8x1xf32, #tpu.memory_space<vmem>>, vector<8x1xf32>
    tpu.vector_store %arg9[%c0_73, %c0_74], %336 {strides = array<i32>} : memref<8x1xf32, #tpu.memory_space<vmem>>, vector<8x1xf32>,
    return
  }
}

</mosaic_0001>

<llo_original>
// kernel: lstm_forward.1
$region0: #{lstm_forward.1}
  #allocation0 [shape = 'u32[]', space=smem, size = 0x4, offset = 0x4, fixed_abs, tag = 'smem constant byte address 0x4 - core index']
  #allocation1 [shape = 'u32[144,128]{1,0:T(1,128)}', space=vmem, size = 0x12000, scoped, tag = 'internal scratch']
  #allocation2 [shape = 'f32[64,128]{1,0:T(8,128)}', space=vmem, size = 0x8000, scoped, tag = 'scratch operand']
  #allocation3 [shape = 'f32[1,1]{1,0:T(1,128)S(1)}', space=vmem, size = 0x200, scoped, tag = 'scoped memory for lstm_forward.1']
  %s0 = inlined_call_operand.vmem [shape: f32[64,32], index: 0, kind: input, shape index: {}]
  %s1 = inlined_call_operand.vmem [shape: f32[32,128], index: 1, kind: input, shape index: {}]
  %s2 = inlined_call_operand.vmem [shape: f32[32,128], index: 2, kind: input, shape index: {}]
  %s3 = inlined_call_operand.vmem [shape: f32[1,128], index: 3, kind: input, shape index: {}]
  %s4 = inlined_call_operand.vmem [shape: f32[32,128], index: 4, kind: input, shape index: {}]
  %s5 = inlined_call_operand.vmem [shape: f32[32,128], index: 5, kind: input, shape index: {}]
  %s6 = inlined_call_operand.vmem [shape: f32[1,128], index: 6, kind: input, shape index: {}]
  %s7 = inlined_call_operand.vmem [shape: f32[1,32], index: 7, kind: input, shape index: {}]
  %s8 = inlined_call_operand.<no memory space> [shape: f32[1,1], index: 8, kind: input, shape index: {}]
  %s9 = inlined_call_operand.vmem [shape: f32[8,1], index: 9, kind: output, shape index: {}]
  %s10 = sld [smem:[#allocation0]]
  $region46: #{lstm_forward.1} parent=0
    _
  %s12 = ssub.s32 1, %s10
  %s13 = scalar_select 0, %s12, %s10
  %v14 = vstv %s8
  %15 = vst [vmem:[#allocation3] sm:$0x1] %v14
  // Predicated region
  $region2: #{lstm_forward.1} parent=0 // pred_check
    _
  $region3: #{lstm_forward.1} parent=0 // pred_check_branch
    %17 = sbr.rel (0) target = $region5
  $region4: #{lstm_forward.1} parent=0 // pred_region
    _
  $region5: #{lstm_forward.1} parent=0 // pred_fallthru
    _
  // Predicated region
  $region6: #{lstm_forward.1} parent=0 // pred_check
    _
  $region7: #{lstm_forward.1} parent=0 // pred_check_branch
    %19 = sbr.rel (0) target = $region9
  $region8: #{lstm_forward.1} parent=0 // pred_region
    _
  $region9: #{lstm_forward.1} parent=0 // pred_fallthru
    _
  // Predicated region
  $region10: #{lstm_forward.1} parent=0 // pred_check
    _
  $region11: #{lstm_forward.1} parent=0 // pred_check_branch
    %21 = sbr.rel (0) target = $region13
  $region12: #{lstm_forward.1} parent=0 // pred_region
    _
  $region13: #{lstm_forward.1} parent=0 // pred_fallthru
    _
  // Predicated region
  $region14: #{lstm_forward.1} parent=0 // pred_check
    _
  $region15: #{lstm_forward.1} parent=0 // pred_check_branch
    %23 = sbr.rel (0) target = $region17
  $region16: #{lstm_forward.1} parent=0 // pred_region
    _
  $region17: #{lstm_forward.1} parent=0 // pred_fallthru
    _
  // Predicated region
  $region18: #{lstm_forward.1} parent=0 // pred_check
    _
  $region19: #{lstm_forward.1} parent=0 // pred_check_branch
    %25 = sbr.rel (0) target = $region21
  $region20: #{lstm_forward.1} parent=0 // pred_region
    _
  $region21: #{lstm_forward.1} parent=0 // pred_fallthru
    _
  // Predicated region
  $region22: #{lstm_forward.1} parent=0 // pred_check
    _
  $region23: #{lstm_forward.1} parent=0 // pred_check_branch
    %27 = sbr.rel (0) target = $region25
  $region24: #{lstm_forward.1} parent=0 // pred_region
    _
  $region25: #{lstm_forward.1} parent=0 // pred_fallthru
    _
  // Predicated region
  $region26: #{lstm_forward.1} parent=0 // pred_check
    _
  $region27: #{lstm_forward.1} parent=0 // pred_check_branch
    %29 = sbr.rel (0) target = $region29
  $region28: #{lstm_forward.1} parent=0 // pred_region
    _
  $region29: #{lstm_forward.1} parent=0 // pred_fallthru
    _
  // Predicated region
  $region30: #{lstm_forward.1} parent=0 // pred_check
    _
  $region31: #{lstm_forward.1} parent=0 // pred_check_branch
    %31 = sbr.rel (0) target = $region33
  $region32: #{lstm_forward.1} parent=0 // pred_region
    _
  $region33: #{lstm_forward.1} parent=0 // pred_fallthru
    _
  // Predicated region
  $region34: #{lstm_forward.1} parent=0 // pred_check
    _
  $region35: #{lstm_forward.1} parent=0 // pred_check_branch
    %33 = sbr.rel (0) target = $region37
  $region36: #{lstm_forward.1} parent=0 // pred_region
    _
  $region37: #{lstm_forward.1} parent=0 // pred_fallthru
    _
  %v34 = vld [vmem:[%s0] sm:$0xff]
  %v35 = vld [vmem:[%s0 + $0x8] sm:$0xff]
  %v36 = vld [vmem:[%s0 + $0x10] sm:$0xff]
  %v37 = vld [vmem:[%s0 + $0x18] sm:$0xff]
  %v38 = vld [vmem:[%s0 + $0x20] sm:$0xff]
  %v39 = vld [vmem:[%s0 + $0x28] sm:$0xff]
  %v40 = vld [vmem:[%s0 + $0x30] sm:$0xff]
  %v41 = vld [vmem:[%s0 + $0x38] sm:$0xff]
  %v42 = vld [vmem:[%s1] sm:$0xff]
  %v43 = vld [vmem:[%s1 + $0x8] sm:$0xff]
  %v44 = vld [vmem:[%s1 + $0x10] sm:$0xff]
  %v45 = vld [vmem:[%s1 + $0x18] sm:$0xff]
  %v46 = vld [vmem:[%s3] sm:$0x1]
  %v48 = vlaneseq
  %v49 = vshrl.u32 %v48, 7
  %v50 = vsub.s32 0, %v49
  %v51 = vrot.slane %v46, %v50
  %vm53 = vcmask 261120
  %v55 = vsel %vm53, %v34, 0
  %v58 = vsel %vm53, %v35, 0
  %v61 = vsel %vm53, %v36, 0
  %v64 = vsel %vm53, %v37, 0
  %v67 = vsel %vm53, %v38, 0
  %v70 = vsel %vm53, %v39, 0
  %v73 = vsel %vm53, %v40, 0
  %v76 = vsel %vm53, %v41, 0
  %78 = vmatprep.subr.mxu0 0.0
  %79 = vmatpush1.msra.mxu0 %v42
  %80 = vmatprep.subr.mxu0 0.0
  %81 = vmatpush1.msra.mxu0 %v43
  %82 = vmatprep.subr.mxu0 0.0
  %83 = vmatpush1.msra.mxu0 %v44
  %84 = vmatprep.subr.mxu0 0.0
  %85 = vmatpush1.msra.mxu0 %v45
  %86 = vmatprep.subr.mxu0 0.0
  %87 = vmatpush1.msra.mxu0 0.0
  %88 = vmatprep.subr.mxu0 0.0
  %89 = vmatpush1.msra.mxu0 0.0
  %90 = vmatprep.subr.mxu0 0.0
  %91 = vmatpush1.msra.mxu0 0.0
  %92 = vmatprep.subr.mxu0 0.0
  %93 = vmatpush1.msra.mxu0 0.0
  %94 = vmatprep.subr.mxu0 0.0
  %95 = vmatpush1.msra.mxu0 0.0
  %96 = vmatprep.subr.mxu0 0.0
  %97 = vmatpush1.msra.mxu0 0.0
  %98 = vmatprep.subr.mxu0 0.0
  %99 = vmatpush1.msra.mxu0 0.0
  %100 = vmatprep.subr.mxu0 0.0
  %101 = vmatpush1.msra.mxu0 0.0
  %102 = vmatprep.subr.mxu0 0.0
  %103 = vmatpush1.msra.mxu0 0.0
  %104 = vmatprep.subr.mxu0 0.0
  %105 = vmatpush1.msra.mxu0 0.0
  %106 = vmatprep.subr.mxu0 0.0
  %107 = vmatpush1.msra.mxu0 0.0
  %108 = vmatprep.subr.mxu0 0.0
  %109 = vmatpush1.msra.mxu0 0.0
  %110 = vmatprep.subr.mxu0 0.0
  %111 = vmatpush1.msra.mxu0 0.0
  %112 = vmatprep.subr.mxu0 0.0
  %113 = vmatpush1.msra.mxu0 0.0
  %114 = vmatprep.subr.mxu0 0.0
  %115 = vmatpush1.msra.mxu0 0.0
  %116 = vmatprep.subr.mxu0 0.0
  %117 = vmatpush1.msra.mxu0 0.0
  %118 = vmatprep.subr.mxu0 0.0
  %119 = vmatpush1.msra.mxu0 0.0
  %120 = vmatprep.subr.mxu0 0.0
  %121 = vmatpush1.msra.mxu0 0.0
  %122 = vmatprep.subr.mxu0 0.0
  %123 = vmatpush1.msra.mxu0 0.0
  %124 = vmatprep.subr.mxu0 0.0
  %125 = vmatpush1.msra.mxu0 0.0
  %126 = vmatprep.subr.mxu0 0.0
  %127 = vmatpush1.msra.mxu0 0.0
  %128 = vmatprep.subr.mxu0 0.0
  %129 = vmatpush1.msra.mxu0 0.0
  %130 = vmatprep.subr.mxu0 0.0
  %131 = vmatpush1.msra.mxu0 0.0
  %132 = vmatprep.subr.mxu0 0.0
  %133 = vmatpush1.msra.mxu0 0.0
  %134 = vmatprep.subr.mxu0 0.0
  %135 = vmatpush1.msra.mxu0 0.0
  %136 = vmatprep.subr.mxu0 0.0
  %137 = vmatpush1.msra.mxu0 0.0
  %138 = vmatprep.subr.mxu0 0.0
  %139 = vmatpush1.msra.mxu0 0.0
  %140 = vmatprep.subr.mxu0 0.0
  %141 = vmatpush1.msra.mxu0 0.0
  %142 = vmatprep.mubr.f32.mxu0 0.0
  %143 = vmatmul.mubr.f32.gmra.mrb[0].mxu0 %v55
  %v144 = vpop.f32.mrb[0].mxu0
  %v145 = vadd.f32 %v51, %v144
  %v146 = vpop.f32.mrb[0].mxu0
  %147 = vmatprep.mubr.f32.mxu0 0.0
  %148 = vmatmul.mubr.f32.gmra.mrb[0].mxu0 %v58
  %v149 = vpop.f32.mrb[0].mxu0
  %v150 = vadd.f32 %v51, %v149
  %v151 = vpop.f32.mrb[0].mxu0
  %152 = vmatprep.mubr.f32.mxu0 0.0
  %153 = vmatmul.mubr.f32.gmra.mrb[0].mxu0 %v61
  %v154 = vpop.f32.mrb[0].mxu0
  %v155 = vadd.f32 %v51, %v154
  %v156 = vpop.f32.mrb[0].mxu0
  %157 = vmatprep.mubr.f32.mxu0 0.0
  %158 = vmatmul.mubr.f32.gmra.mrb[0].mxu0 %v64
  %v159 = vpop.f32.mrb[0].mxu0
  %v160 = vadd.f32 %v51, %v159
  %v161 = vpop.f32.mrb[0].mxu0
  %162 = vmatprep.mubr.f32.mxu0 0.0
  %163 = vmatmul.mubr.f32.gmra.mrb[0].mxu0 %v67
  %v164 = vpop.f32.mrb[0].mxu0
  %v165 = vadd.f32 %v51, %v164
  %v166 = vpop.f32.mrb[0].mxu0
  %167 = vmatprep.mubr.f32.mxu0 0.0
  %168 = vmatmul.mubr.f32.gmra.mrb[0].mxu0 %v70
  %v169 = vpop.f32.mrb[0].mxu0
  %v170 = vadd.f32 %v51, %v169
  %v171 = vpop.f32.mrb[0].mxu0
  %172 = vmatprep.mubr.f32.mxu0 0.0
  %173 = vmatmul.mubr.f32.gmra.mrb[0].mxu0 %v73
  %v174 = vpop.f32.mrb[0].mxu0
  %v175 = vadd.f32 %v51, %v174
  %v176 = vpop.f32.mrb[0].mxu0
  %177 = vmatprep.mubr.f32.mxu0 0.0
  %178 = vmatmul.mubr.f32.gmra.mrb[0].mxu0 %v76
  %v179 = vpop.f32.mrb[0].mxu0
  %v180 = vadd.f32 %v51, %v179
  %v181 = vpop.f32.mrb[0].mxu0
  %182 = vdwg.mxu0
  %183 = vst [vmem:[#allocation2] sm:$0xff] %v145
  %184 = vst [vmem:[#allocation2 + $0x8] sm:$0xff] %v150
  %185 = vst [vmem:[#allocation2 + $0x10] sm:$0xff] %v155
  %186 = vst [vmem:[#allocation2 + $0x18] sm:$0xff] %v160
  %187 = vst [vmem:[#allocation2 + $0x20] sm:$0xff] %v165
  %188 = vst [vmem:[#allocation2 + $0x28] sm:$0xff] %v170
  %189 = vst [vmem:[#allocation2 + $0x30] sm:$0xff] %v175
  %190 = vst [vmem:[#allocation2 + $0x38] sm:$0xff] %v180
  %v191 = vld [vmem:[%s2] sm:$0xff]
  %v192 = vld [vmem:[%s2 + $0x8] sm:$0xff]
  %v193 = vld [vmem:[%s2 + $0x10] sm:$0xff]
  %v194 = vld [vmem:[%s2 + $0x18] sm:$0xff]
  %v195 = vld [vmem:[%s4] sm:$0xff]
  %v196 = vld [vmem:[%s4 + $0x8] sm:$0xff]
  %v197 = vld [vmem:[%s4 + $0x10] sm:$0xff]
  %v198 = vld [vmem:[%s4 + $0x18] sm:$0xff]
  %v199 = vld [vmem:[%s5] sm:$0xff]
  %v200 = vld [vmem:[%s5 + $0x8] sm:$0xff]
  %v201 = vld [vmem:[%s5 + $0x10] sm:$0xff]
  %v202 = vld [vmem:[%s5 + $0x18] sm:$0xff]
  %v203 = vld [vmem:[%s6] sm:$0x1]
  %v205 = vlaneseq
  %v206 = vshrl.u32 %v205, 7
  %v207 = vsub.s32 0, %v206
  %v208 = vrot.slane %v203, %v207
  %v211 = vsel %vm53, 0.0, 0
  %213 = vmatprep.subr.mxu0 0.0
  %214 = vmatpush1.msra.mxu0 %v199
  %215 = vmatprep.subr.mxu0 0.0
  %216 = vmatpush1.msra.mxu0 %v200
  %217 = vmatprep.subr.mxu0 0.0
  %218 = vmatpush1.msra.mxu0 %v201
  %219 = vmatprep.subr.mxu0 0.0
  %220 = vmatpush1.msra.mxu0 %v202
  %221 = vmatprep.subr.mxu0 0.0
  %222 = vmatpush1.msra.mxu0 0.0
  %223 = vmatprep.subr.mxu0 0.0
  %224 = vmatpush1.msra.mxu0 0.0
  %225 = vmatprep.subr.mxu0 0.0
  %226 = vmatpush1.msra.mxu0 0.0
  %227 = vmatprep.subr.mxu0 0.0
  %228 = vmatpush1.msra.mxu0 0.0
  %229 = vmatprep.subr.mxu0 0.0
  %230 = vmatpush1.msra.mxu0 0.0
  %231 = vmatprep.subr.mxu0 0.0
  %232 = vmatpush1.msra.mxu0 0.0
  %233 = vmatprep.subr.mxu0 0.0
  %234 = vmatpush1.msra.mxu0 0.0
  %235 = vmatprep.subr.mxu0 0.0
  %236 = vmatpush1.msra.mxu0 0.0
  %237 = vmatprep.subr.mxu0 0.0
  %238 = vmatpush1.msra.mxu0 0.0
  %239 = vmatprep.subr.mxu0 0.0
  %240 = vmatpush1.msra.mxu0 0.0
  %241 = vmatprep.subr.mxu0 0.0
  %242 = vmatpush1.msra.mxu0 0.0
  %243 = vmatprep.subr.mxu0 0.0
  %244 = vmatpush1.msra.mxu0 0.0
  %245 = vmatprep.subr.mxu0 0.0
  %246 = vmatpush1.msra.mxu0 0.0
  %247 = vmatprep.subr.mxu0 0.0
  %248 = vmatpush1.msra.mxu0 0.0
  %249 = vmatprep.subr.mxu0 0.0
  %250 = vmatpush1.msra.mxu0 0.0
  %251 = vmatprep.subr.mxu0 0.0
  %252 = vmatpush1.msra.mxu0 0.0
  %253 = vmatprep.subr.mxu0 0.0
  %254 = vmatpush1.msra.mxu0 0.0
  %255 = vmatprep.subr.mxu0 0.0
  %256 = vmatpush1.msra.mxu0 0.0
  %257 = vmatprep.subr.mxu0 0.0
  %258 = vmatpush1.msra.mxu0 0.0
  %259 = vmatprep.subr.mxu0 0.0
  %260 = vmatpush1.msra.mxu0 0.0
  %261 = vmatprep.subr.mxu0 0.0
  %262 = vmatpush1.msra.mxu0 0.0
  %263 = vmatprep.subr.mxu0 0.0
  %264 = vmatpush1.msra.mxu0 0.0
  %265 = vmatprep.subr.mxu0 0.0
  %266 = vmatpush1.msra.mxu0 0.0
  %267 = vmatprep.subr.mxu0 0.0
  %268 = vmatpush1.msra.mxu0 0.0
  %269 = vmatprep.subr.mxu0 0.0
  %270 = vmatpush1.msra.mxu0 0.0
  %271 = vmatprep.subr.mxu0 0.0
  %272 = vmatpush1.msra.mxu0 0.0
  %273 = vmatprep.subr.mxu0 0.0
  %274 = vmatpush1.msra.mxu0 0.0
  %275 = vmatprep.subr.mxu0 0.0
  %276 = vmatpush1.msra.mxu0 0.0
  %277 = vmatprep.mubr.f32.mxu0 0.0
  %278 = vmatmul.mubr.f32.gmra.mrb[0].mxu0 %v211
  %v279 = vpop.f32.mrb[0].mxu0
  %v280 = vadd.f32 %v208, %v279
  %v281 = vpop.f32.mrb[0].mxu0
  %282 = vdwg.mxu0
  %v283 = vld [vmem:[#allocation2] sm:$0xff]
  %284 = vmatprep.subr.mxu0 0.0
  %285 = vmatpush1.msra.mxu0 %v191
  %286 = vmatprep.subr.mxu0 0.0
  %287 = vmatpush1.msra.mxu0 %v192
  %288 = vmatprep.subr.mxu0 0.0
  %289 = vmatpush1.msra.mxu0 %v193
  %290 = vmatprep.subr.mxu0 0.0
  %291 = vmatpush1.msra.mxu0 %v194
  %292 = vmatprep.subr.mxu0 0.0
  %293 = vmatpush1.msra.mxu0 0.0
  %294 = vmatprep.subr.mxu0 0.0
  %295 = vmatpush1.msra.mxu0 0.0
  %296 = vmatprep.subr.mxu0 0.0
  %297 = vmatpush1.msra.mxu0 0.0
  %298 = vmatprep.subr.mxu0 0.0
  %299 = vmatpush1.msra.mxu0 0.0
  %300 = vmatprep.subr.mxu0 0.0
  %301 = vmatpush1.msra.mxu0 0.0
  %302 = vmatprep.subr.mxu0 0.0
  %303 = vmatpush1.msra.mxu0 0.0
  %304 = vmatprep.subr.mxu0 0.0
  %305 = vmatpush1.msra.mxu0 0.0
  %306 = vmatprep.subr.mxu0 0.0
  %307 = vmatpush1.msra.mxu0 0.0
  %308 = vmatprep.subr.mxu0 0.0
  %309 = vmatpush1.msra.mxu0 0.0
  %310 = vmatprep.subr.mxu0 0.0
  %311 = vmatpush1.msra.mxu0 0.0
  %312 = vmatprep.subr.mxu0 0.0
  %313 = vmatpush1.msra.mxu0 0.0
  %314 = vmatprep.subr.mxu0 0.0
  %315 = vmatpush1.msra.mxu0 0.0
  %316 = vmatprep.subr.mxu0 0.0
  %317 = vmatpush1.msra.mxu0 0.0
  %318 = vmatprep.subr.mxu0 0.0
  %319 = vmatpush1.msra.mxu0 0.0
  %320 = vmatprep.subr.mxu0 0.0
  %321 = vmatpush1.msra.mxu0 0.0
  %322 = vmatprep.subr.mxu0 0.0
  %323 = vmatpush1.msra.mxu0 0.0
  %324 = vmatprep.subr.mxu0 0.0
  %325 = vmatpush1.msra.mxu0 0.0
  %326 = vmatprep.subr.mxu0 0.0
  %327 = vmatpush1.msra.mxu0 0.0
  %328 = vmatprep.subr.mxu0 0.0
  %329 = vmatpush1.msra.mxu0 0.0
  %330 = vmatprep.subr.mxu0 0.0
  %331 = vmatpush1.msra.mxu0 0.0
  %332 = vmatprep.subr.mxu0 0.0
  %333 = vmatpush1.msra.mxu0 0.0
  %334 = vmatprep.subr.mxu0 0.0
  %335 = vmatpush1.msra.mxu0 0.0
  %336 = vmatprep.subr.mxu0 0.0
  %337 = vmatpush1.msra.mxu0 0.0
  %338 = vmatprep.subr.mxu0 0.0
  %339 = vmatpush1.msra.mxu0 0.0
  %340 = vmatprep.subr.mxu0 0.0
  %341 = vmatpush1.msra.mxu0 0.0
  %342 = vmatprep.subr.mxu0 0.0
  %343 = vmatpush1.msra.mxu0 0.0
  %344 = vmatprep.subr.mxu0 0.0
  %345 = vmatpush1.msra.mxu0 0.0
  %346 = vmatprep.subr.mxu0 0.0
  %347 = vmatpush1.msra.mxu0 0.0
  %348 = vmatprep.mubr.f32.mxu0 0.0
  %349 = vmatmul.mubr.f32.gmra.mrb[0].mxu0 %v211
  %v350 = vpop.f32.mrb[0].mxu0
  %v351 = vadd.f32 0.0, %v350
  %v352 = vpop.f32.mrb[0].mxu0
  %353 = vdwg.mxu0
  %v354 = vadd.f32 %v283, %v351
  %v355 = vxor.u32 %v354, 2147483648
  %v356 = vmul.f32 %v355, 1.442695
  %v357 = vpow.pop %v356
  %v358 = vadd.f32 %v357, 1.0
  %v359 = vrcp.pop %v358
  %v360 = vmul.f32 1.0, %v359
  %v361 = vtanh.pop %v354
  %v362 = vmul.f32 %v360, 0.0
  %364 = vrot.lane.b32.xlu0 %v361, 32
  %v365 = vpop.permute.xlu0 %364
  %v367 = vmul.f32 %v360, %v365
  %369 = vrot.lane.b32.xlu0 %v367, 32
  %v370 = vpop.permute.xlu0 %369
  %v372 = vadd.f32 %v362, %v370
  %v373 = vtanh.pop %v372
  %375 = vrot.lane.b32.xlu0 %v373, 32
  %v376 = vpop.permute.xlu0 %375
  %v378 = vmul.f32 %v360, %v376
  %380 = vrot.lane.b32.xlu0 %v378, 64
  %v381 = vpop.permute.xlu0 %380
  %v382 = vsel %vm53, %v381, 0
  %384 = vmatprep.subr.mxu0 0.0
  %385 = vmatpush1.msra.mxu0 %v195
  %386 = vmatprep.subr.mxu0 0.0
  %387 = vmatpush1.msra.mxu0 %v196
  %388 = vmatprep.subr.mxu0 0.0
  %389 = vmatpush1.msra.mxu0 %v197
  %390 = vmatprep.subr.mxu0 0.0
  %391 = vmatpush1.msra.mxu0 %v198
  %392 = vmatprep.subr.mxu0 0.0
  %393 = vmatpush1.msra.mxu0 0.0
  %394 = vmatprep.subr.mxu0 0.0
  %395 = vmatpush1.msra.mxu0 0.0
  %396 = vmatprep.subr.mxu0 0.0
  %397 = vmatpush1.msra.mxu0 0.0
  %398 = vmatprep.subr.mxu0 0.0
  %399 = vmatpush1.msra.mxu0 0.0
  %400 = vmatprep.subr.mxu0 0.0
  %401 = vmatpush1.msra.mxu0 0.0
  %402 = vmatprep.subr.mxu0 0.0
  %403 = vmatpush1.msra.mxu0 0.0
  %404 = vmatprep.subr.mxu0 0.0
  %405 = vmatpush1.msra.mxu0 0.0
  %406 = vmatprep.subr.mxu0 0.0
  %407 = vmatpush1.msra.mxu0 0.0
  %408 = vmatprep.subr.mxu0 0.0
  %409 = vmatpush1.msra.mxu0 0.0
  %410 = vmatprep.subr.mxu0 0.0
  %411 = vmatpush1.msra.mxu0 0.0
  %412 = vmatprep.subr.mxu0 0.0
  %413 = vmatpush1.msra.mxu0 0.0
  %414 = vmatprep.subr.mxu0 0.0
  %415 = vmatpush1.msra.mxu0 0.0
  %416 = vmatprep.subr.mxu0 0.0
  %417 = vmatpush1.msra.mxu0 0.0
  %418 = vmatprep.subr.mxu0 0.0
  %419 = vmatpush1.msra.mxu0 0.0
  %420 = vmatprep.subr.mxu0 0.0
  %421 = vmatpush1.msra.mxu0 0.0
  %422 = vmatprep.subr.mxu0 0.0
  %423 = vmatpush1.msra.mxu0 0.0
  %424 = vmatprep.subr.mxu0 0.0
  %425 = vmatpush1.msra.mxu0 0.0
  %426 = vmatprep.subr.mxu0 0.0
  %427 = vmatpush1.msra.mxu0 0.0
  %428 = vmatprep.subr.mxu0 0.0
  %429 = vmatpush1.msra.mxu0 0.0
  %430 = vmatprep.subr.mxu0 0.0
  %431 = vmatpush1.msra.mxu0 0.0
  %432 = vmatprep.subr.mxu0 0.0
  %433 = vmatpush1.msra.mxu0 0.0
  %434 = vmatprep.subr.mxu0 0.0
  %435 = vmatpush1.msra.mxu0 0.0
  %436 = vmatprep.subr.mxu0 0.0
  %437 = vmatpush1.msra.mxu0 0.0
  %438 = vmatprep.subr.mxu0 0.0
  %439 = vmatpush1.msra.mxu0 0.0
  %440 = vmatprep.subr.mxu0 0.0
  %441 = vmatpush1.msra.mxu0 0.0
  %442 = vmatprep.subr.mxu0 0.0
  %443 = vmatpush1.msra.mxu0 0.0
  %444 = vmatprep.subr.mxu0 0.0
  %445 = vmatpush1.msra.mxu0 0.0
  %446 = vmatprep.subr.mxu0 0.0
  %447 = vmatpush1.msra.mxu0 0.0
  %448 = vmatprep.mubr.f32.mxu0 0.0
  %449 = vmatmul.mubr.f32.gmra.mrb[0].mxu0 %v382
  %v450 = vpop.f32.mrb[0].mxu0
  %v451 = vadd.f32 0.0, %v450
  %v452 = vpop.f32.mrb[0].mxu0
  %453 = vdwg.mxu0
  %v454 = vadd.f32 %v280, %v451
  %v455 = vxor.u32 %v454, 2147483648
  %v456 = vmul.f32 %v455, 1.442695
  %v457 = vpow.pop %v456
  %v458 = vadd.f32 %v457, 1.0
  %v459 = vrcp.pop %v458
  %v460 = vmul.f32 1.0, %v459
  %v461 = vtanh.pop %v454
  %v462 = vmul.f32 %v460, 0.0
  %464 = vrot.lane.b32.xlu0 %v461, 32
  %v465 = vpop.permute.xlu0 %464
  %v467 = vmul.f32 %v460, %v465
  %469 = vrot.lane.b32.xlu0 %v467, 32
  %v470 = vpop.permute.xlu0 %469
  %v472 = vadd.f32 %v462, %v470
  %v473 = vtanh.pop %v472
  %475 = vrot.lane.b32.xlu0 %v473, 32
  %v476 = vpop.permute.xlu0 %475
  %v478 = vmul.f32 %v460, %v476
  %480 = vrot.lane.b32.xlu0 %v478, 64
  %v481 = vpop.permute.xlu0 %480
  %v482 = vsel %vm53, %v481, 0
  %484 = vmatprep.subr.mxu0 0.0
  %485 = vmatpush1.msra.mxu0 %v199
  %486 = vmatprep.subr.mxu0 0.0
  %487 = vmatpush1.msra.mxu0 %v200
  %488 = vmatprep.subr.mxu0 0.0
  %489 = vmatpush1.msra.mxu0 %v201
  %490 = vmatprep.subr.mxu0 0.0
  %491 = vmatpush1.msra.mxu0 %v202
  %492 = vmatprep.subr.mxu0 0.0
  %493 = vmatpush1.msra.mxu0 0.0
  %494 = vmatprep.subr.mxu0 0.0
  %495 = vmatpush1.msra.mxu0 0.0
  %496 = vmatprep.subr.mxu0 0.0
  %497 = vmatpush1.msra.mxu0 0.0
  %498 = vmatprep.subr.mxu0 0.0
  %499 = vmatpush1.msra.mxu0 0.0
  %500 = vmatprep.subr.mxu0 0.0
  %501 = vmatpush1.msra.mxu0 0.0
  %502 = vmatprep.subr.mxu0 0.0
  %503 = vmatpush1.msra.mxu0 0.0
  %504 = vmatprep.subr.mxu0 0.0
  %505 = vmatpush1.msra.mxu0 0.0
  %506 = vmatprep.subr.mxu0 0.0
  %507 = vmatpush1.msra.mxu0 0.0
  %508 = vmatprep.subr.mxu0 0.0
  %509 = vmatpush1.msra.mxu0 0.0
  %510 = vmatprep.subr.mxu0 0.0
  %511 = vmatpush1.msra.mxu0 0.0
  %512 = vmatprep.subr.mxu0 0.0
  %513 = vmatpush1.msra.mxu0 0.0
  %514 = vmatprep.subr.mxu0 0.0
  %515 = vmatpush1.msra.mxu0 0.0
  %516 = vmatprep.subr.mxu0 0.0
  %517 = vmatpush1.msra.mxu0 0.0
  %518 = vmatprep.subr.mxu0 0.0
  %519 = vmatpush1.msra.mxu0 0.0
  %520 = vmatprep.subr.mxu0 0.0
  %521 = vmatpush1.msra.mxu0 0.0
  %522 = vmatprep.subr.mxu0 0.0
  %523 = vmatpush1.msra.mxu0 0.0
  %524 = vmatprep.subr.mxu0 0.0
  %525 = vmatpush1.msra.mxu0 0.0
  %526 = vmatprep.subr.mxu0 0.0
  %527 = vmatpush1.msra.mxu0 0.0
  %528 = vmatprep.subr.mxu0 0.0
  %529 = vmatpush1.msra.mxu0 0.0
  %530 = vmatprep.subr.mxu0 0.0
  %531 = vmatpush1.msra.mxu0 0.0
  %532 = vmatprep.subr.mxu0 0.0
  %533 = vmatpush1.msra.mxu0 0.0
  %534 = vmatprep.subr.mxu0 0.0
  %535 = vmatpush1.msra.mxu0 0.0
  %536 = vmatprep.subr.mxu0 0.0
  %537 = vmatpush1.msra.mxu0 0.0
  %538 = vmatprep.subr.mxu0 0.0
  %539 = vmatpush1.msra.mxu0 0.0
  %540 = vmatprep.subr.mxu0 0.0
  %541 = vmatpush1.msra.mxu0 0.0
  %542 = vmatprep.subr.mxu0 0.0
  %543 = vmatpush1.msra.mxu0 0.0
  %544 = vmatprep.subr.mxu0 0.0
  %545 = vmatpush1.msra.mxu0 0.0
  %546 = vmatprep.subr.mxu0 0.0
  %547 = vmatpush1.msra.mxu0 0.0
  %548 = vmatprep.mubr.f32.mxu0 0.0
  %549 = vmatmul.mubr.f32.gmra.mrb[0].mxu0 %v482
  %v550 = vpop.f32.mrb[0].mxu0
  %v551 = vadd.f32 %v208, %v550
  %v552 = vpop.f32.mrb[0].mxu0
  %553 = vdwg.mxu0
  %v554 = vld [vmem:[#allocation2 + $0x8] sm:$0xff]
  %555 = vmatprep.subr.mxu0 0.0
  %556 = vmatpush1.msra.mxu0 %v191
  %557 = vmatprep.subr.mxu0 0.0
  %558 = vmatpush1.msra.mxu0 %v192
  %559 = vmatprep.subr.mxu0 0.0
  %560 = vmatpush1.msra.mxu0 %v193
  %561 = vmatprep.subr.mxu0 0.0
  %562 = vmatpush1.msra.mxu0 %v194
  %563 = vmatprep.subr.mxu0 0.0
  %564 = vmatpush1.msra.mxu0 0.0
  %565 = vmatprep.subr.mxu0 0.0
  %566 = vmatpush1.msra.mxu0 0.0
  %567 = vmatprep.subr.mxu0 0.0
  %568 = vmatpush1.msra.mxu0 0.0
  %569 = vmatprep.subr.mxu0 0.0
  %570 = vmatpush1.msra.mxu0 0.0
  %571 = vmatprep.subr.mxu0 0.0
  %572 = vmatpush1.msra.mxu0 0.0
  %573 = vmatprep.subr.mxu0 0.0
  %574 = vmatpush1.msra.mxu0 0.0
  %575 = vmatprep.subr.mxu0 0.0
  %576 = vmatpush1.msra.mxu0 0.0
  %577 = vmatprep.subr.mxu0 0.0
  %578 = vmatpush1.msra.mxu0 0.0
  %579 = vmatprep.subr.mxu0 0.0
  %580 = vmatpush1.msra.mxu0 0.0
  %581 = vmatprep.subr.mxu0 0.0
  %582 = vmatpush1.msra.mxu0 0.0
  %583 = vmatprep.subr.mxu0 0.0
  %584 = vmatpush1.msra.mxu0 0.0
  %585 = vmatprep.subr.mxu0 0.0
  %586 = vmatpush1.msra.mxu0 0.0
  %587 = vmatprep.subr.mxu0 0.0
  %588 = vmatpush1.msra.mxu0 0.0
  %589 = vmatprep.subr.mxu0 0.0
  %590 = vmatpush1.msra.mxu0 0.0
  %591 = vmatprep.subr.mxu0 0.0
  %592 = vmatpush1.msra.mxu0 0.0
  %593 = vmatprep.subr.mxu0 0.0
  %594 = vmatpush1.msra.mxu0 0.0
  %595 = vmatprep.subr.mxu0 0.0
  %596 = vmatpush1.msra.mxu0 0.0
  %597 = vmatprep.subr.mxu0 0.0
  %598 = vmatpush1.msra.mxu0 0.0
  %599 = vmatprep.subr.mxu0 0.0
  %600 = vmatpush1.msra.mxu0 0.0
  %601 = vmatprep.subr.mxu0 0.0
  %602 = vmatpush1.msra.mxu0 0.0
  %603 = vmatprep.subr.mxu0 0.0
  %604 = vmatpush1.msra.mxu0 0.0
  %605 = vmatprep.subr.mxu0 0.0
  %606 = vmatpush1.msra.mxu0 0.0
  %607 = vmatprep.subr.mxu0 0.0
  %608 = vmatpush1.msra.mxu0 0.0
  %609 = vmatprep.subr.mxu0 0.0
  %610 = vmatpush1.msra.mxu0 0.0
  %611 = vmatprep.subr.mxu0 0.0
  %612 = vmatpush1.msra.mxu0 0.0
  %613 = vmatprep.subr.mxu0 0.0
  %614 = vmatpush1.msra.mxu0 0.0
  %615 = vmatprep.subr.mxu0 0.0
  %616 = vmatpush1.msra.mxu0 0.0
  %617 = vmatprep.subr.mxu0 0.0
  %618 = vmatpush1.msra.mxu0 0.0
  %619 = vmatprep.mubr.f32.mxu0 0.0
  %620 = vmatmul.mubr.f32.gmra.mrb[0].mxu0 %v382
  %v621 = vpop.f32.mrb[0].mxu0
  %v622 = vadd.f32 0.0, %v621
  %v623 = vpop.f32.mrb[0].mxu0
  %624 = vdwg.mxu0
  %v625 = vadd.f32 %v554, %v622
  %v626 = vxor.u32 %v625, 2147483648
  %v627 = vmul.f32 %v626, 1.442695
  %v628 = vpow.pop %v627
  %v629 = vadd.f32 %v628, 1.0
  %v630 = vrcp.pop %v629
  %v631 = vmul.f32 1.0, %v630
  %v632 = vtanh.pop %v625
  %v633 = vmul.f32 %v631, %v372
  %635 = vrot.lane.b32.xlu0 %v632, 32
  %v636 = vpop.permute.xlu0 %635
  %v638 = vmul.f32 %v631, %v636
  %640 = vrot.lane.b32.xlu0 %v638, 32
  %v641 = vpop.permute.xlu0 %640
  %v643 = vadd.f32 %v633, %v641
  %v644 = vtanh.pop %v643
  %646 = vrot.lane.b32.xlu0 %v644, 32
  %v647 = vpop.permute.xlu0 %646
  %v649 = vmul.f32 %v631, %v647
  %651 = vrot.lane.b32.xlu0 %v649, 64
  %v652 = vpop.permute.xlu0 %651
  %v653 = vsel %vm53, %v652, 0
  %655 = vmatprep.subr.mxu0 0.0
  %656 = vmatpush1.msra.mxu0 %v195
  %657 = vmatprep.subr.mxu0 0.0
  %658 = vmatpush1.msra.mxu0 %v196
  %659 = vmatprep.subr.mxu0 0.0
  %660 = vmatpush1.msra.mxu0 %v197
  %661 = vmatprep.subr.mxu0 0.0
  %662 = vmatpush1.msra.mxu0 %v198
  %663 = vmatprep.subr.mxu0 0.0
  %664 = vmatpush1.msra.mxu0 0.0
  %665 = vmatprep.subr.mxu0 0.0
  %666 = vmatpush1.msra.mxu0 0.0
  %667 = vmatprep.subr.mxu0 0.0
  %668 = vmatpush1.msra.mxu0 0.0
  %669 = vmatprep.subr.mxu0 0.0
  %670 = vmatpush1.msra.mxu0 0.0
  %671 = vmatprep.subr.mxu0 0.0
  %672 = vmatpush1.msra.mxu0 0.0
  %673 = vmatprep.subr.mxu0 0.0
  %674 = vmatpush1.msra.mxu0 0.0
  %675 = vmatprep.subr.mxu0 0.0
  %676 = vmatpush1.msra.mxu0 0.0
  %677 = vmatprep.subr.mxu0 0.0
  %678 = vmatpush1.msra.mxu0 0.0
  %679 = vmatprep.subr.mxu0 0.0
  %680 = vmatpush1.msra.mxu0 0.0
  %681 = vmatprep.subr.mxu0 0.0
  %682 = vmatpush1.msra.mxu0 0.0
  %683 = vmatprep.subr.mxu0 0.0
  %684 = vmatpush1.msra.mxu0 0.0
  %685 = vmatprep.subr.mxu0 0.0
  %686 = vmatpush1.msra.mxu0 0.0
  %687 = vmatprep.subr.mxu0 0.0
  %688 = vmatpush1.msra.mxu0 0.0
  %689 = vmatprep.subr.mxu0 0.0
  %690 = vmatpush1.msra.mxu0 0.0
  %691 = vmatprep.subr.mxu0 0.0
  %692 = vmatpush1.msra.mxu0 0.0
  %693 = vmatprep.subr.mxu0 0.0
  %694 = vmatpush1.msra.mxu0 0.0
  %695 = vmatprep.subr.mxu0 0.0
  %696 = vmatpush1.msra.mxu0 0.0
  %697 = vmatprep.subr.mxu0 0.0
  %698 = vmatpush1.msra.mxu0 0.0
  %699 = vmatprep.subr.mxu0 0.0
  %700 = vmatpush1.msra.mxu0 0.0
  %701 = vmatprep.subr.mxu0 0.0
  %702 = vmatpush1.msra.mxu0 0.0
  %703 = vmatprep.subr.mxu0 0.0
  %704 = vmatpush1.msra.mxu0 0.0
  %705 = vmatprep.subr.mxu0 0.0
  %706 = vmatpush1.msra.mxu0 0.0
  %707 = vmatprep.subr.mxu0 0.0
  %708 = vmatpush1.msra.mxu0 0.0
  %709 = vmatprep.subr.mxu0 0.0
  %710 = vmatpush1.msra.mxu0 0.0
  %711 = vmatprep.subr.mxu0 0.0
  %712 = vmatpush1.msra.mxu0 0.0
  %713 = vmatprep.subr.mxu0 0.0
  %714 = vmatpush1.msra.mxu0 0.0
  %715 = vmatprep.subr.mxu0 0.0
  %716 = vmatpush1.msra.mxu0 0.0
  %717 = vmatprep.subr.mxu0 0.0
  %718 = vmatpush1.msra.mxu0 0.0
  %719 = vmatprep.mubr.f32.mxu0 0.0
  %720 = vmatmul.mubr.f32.gmra.mrb[0].mxu0 %v653
  %v721 = vpop.f32.mrb[0].mxu0
  %v722 = vadd.f32 0.0, %v721
  %v723 = vpop.f32.mrb[0].mxu0
  %724 = vdwg.mxu0
  %v725 = vadd.f32 %v551, %v722
  %v726 = vxor.u32 %v725, 2147483648
  %v727 = vmul.f32 %v726, 1.442695
  %v728 = vpow.pop %v727
  %v729 = vadd.f32 %v728, 1.0
  %v730 = vrcp.pop %v729
  %v731 = vmul.f32 1.0, %v730
  %v732 = vtanh.pop %v725
  %v733 = vmul.f32 %v731, %v472
  %735 = vrot.lane.b32.xlu0 %v732, 32
  %v736 = vpop.permute.xlu0 %735
  %v738 = vmul.f32 %v731, %v736
  %740 = vrot.lane.b32.xlu0 %v738, 32
  %v741 = vpop.permute.xlu0 %740
  %v743 = vadd.f32 %v733, %v741
  %v744 = vtanh.pop %v743
  %746 = vrot.lane.b32.xlu0 %v744, 32
  %v747 = vpop.permute.xlu0 %746
  %v749 = vmul.f32 %v731, %v747
  %751 = vrot.lane.b32.xlu0 %v749, 64
  %v752 = vpop.permute.xlu0 %751
  %v753 = vsel %vm53, %v752, 0
  %755 = vmatprep.subr.mxu0 0.0
  %756 = vmatpush1.msra.mxu0 %v199
  %757 = vmatprep.subr.mxu0 0.0
  %758 = vmatpush1.msra.mxu0 %v200
  %759 = vmatprep.subr.mxu0 0.0
  %760 = vmatpush1.msra.mxu0 %v201
  %761 = vmatprep.subr.mxu0 0.0
  %762 = vmatpush1.msra.mxu0 %v202
  %763 = vmatprep.subr.mxu0 0.0
  %764 = vmatpush1.msra.mxu0 0.0
  %765 = vmatprep.subr.mxu0 0.0
  %766 = vmatpush1.msra.mxu0 0.0
  %767 = vmatprep.subr.mxu0 0.0
  %768 = vmatpush1.msra.mxu0 0.0
  %769 = vmatprep.subr.mxu0 0.0
  %770 = vmatpush1.msra.mxu0 0.0
  %771 = vmatprep.subr.mxu0 0.0
  %772 = vmatpush1.msra.mxu0 0.0
  %773 = vmatprep.subr.mxu0 0.0
  %774 = vmatpush1.msra.mxu0 0.0
  %775 = vmatprep.subr.mxu0 0.0
  %776 = vmatpush1.msra.mxu0 0.0
  %777 = vmatprep.subr.mxu0 0.0
  %778 = vmatpush1.msra.mxu0 0.0
  %779 = vmatprep.subr.mxu0 0.0
  %780 = vmatpush1.msra.mxu0 0.0
  %781 = vmatprep.subr.mxu0 0.0
  %782 = vmatpush1.msra.mxu0 0.0
  %783 = vmatprep.subr.mxu0 0.0
  %784 = vmatpush1.msra.mxu0 0.0
  %785 = vmatprep.subr.mxu0 0.0
  %786 = vmatpush1.msra.mxu0 0.0
  %787 = vmatprep.subr.mxu0 0.0
  %788 = vmatpush1.msra.mxu0 0.0
  %789 = vmatprep.subr.mxu0 0.0
  %790 = vmatpush1.msra.mxu0 0.0
  %791 = vmatprep.subr.mxu0 0.0
  %792 = vmatpush1.msra.mxu0 0.0
  %793 = vmatprep.subr.mxu0 0.0
  %794 = vmatpush1.msra.mxu0 0.0
  %795 = vmatprep.subr.mxu0 0.0
  %796 = vmatpush1.msra.mxu0 0.0
  %797 = vmatprep.subr.mxu0 0.0
  %798 = vmatpush1.msra.mxu0 0.0
  %799 = vmatprep.subr.mxu0 0.0
  %800 = vmatpush1.msra.mxu0 0.0
  %801 = vmatprep.subr.mxu0 0.0
  %802 = vmatpush1.msra.mxu0 0.0
  %803 = vmatprep.subr.mxu0 0.0
  %804 = vmatpush1.msra.mxu0 0.0
  %805 = vmatprep.subr.mxu0 0.0
  %806 = vmatpush1.msra.mxu0 0.0
  %807 = vmatprep.subr.mxu0 0.0
  %808 = vmatpush1.msra.mxu0 0.0
  %809 = vmatprep.subr.mxu0 0.0
  %810 = vmatpush1.msra.mxu0 0.0
  %811 = vmatprep.subr.mxu0 0.0
  %812 = vmatpush1.msra.mxu0 0.0
  %813 = vmatprep.subr.mxu0 0.0
  %814 = vmatpush1.msra.mxu0 0.0
  %815 = vmatprep.subr.mxu0 0.0
  %816 = vmatpush1.msra.mxu0 0.0
  %817 = vmatprep.subr.mxu0 0.0
  %818 = vmatpush1.msra.mxu0 0.0
  %819 = vmatprep.mubr.f32.mxu0 0.0
  %820 = vmatmul.mubr.f32.gmra.mrb[0].mxu0 %v753
  %v821 = vpop.f32.mrb[0].mxu0
  %v822 = vadd.f32 %v208, %v821
  %v823 = vpop.f32.mrb[0].mxu0
  %824 = vdwg.mxu0
  %v825 = vld [vmem:[#allocation2 + $0x10] sm:$0xff]
  %826 = vmatprep.subr.mxu0 0.0
  %827 = vmatpush1.msra.mxu0 %v191
  %828 = vmatprep.subr.mxu0 0.0
  %829 = vmatpush1.msra.mxu0 %v192
  %830 = vmatprep.subr.mxu0 0.0
  %831 = vmatpush1.msra.mxu0 %v193
  %832 = vmatprep.subr.mxu0 0.0
  %833 = vmatpush1.msra.mxu0 %v194
  %834 = vmatprep.subr.mxu0 0.0
  %835 = vmatpush1.msra.mxu0 0.0
  %836 = vmatprep.subr.mxu0 0.0
  %837 = vmatpush1.msra.mxu0 0.0
  %838 = vmatprep.subr.mxu0 0.0
  %839 = vmatpush1.msra.mxu0 0.0
  %840 = vmatprep.subr.mxu0 0.0
  %841 = vmatpush1.msra.mxu0 0.0
  %842 = vmatprep.subr.mxu0 0.0
  %843 = vmatpush1.msra.mxu0 0.0
  %844 = vmatprep.subr.mxu0 0.0
  %845 = vmatpush1.msra.mxu0 0.0
  %846 = vmatprep.subr.mxu0 0.0
  %847 = vmatpush1.msra.mxu0 0.0
  %848 = vmatprep.subr.mxu0 0.0
  %849 = vmatpush1.msra.mxu0 0.0
  %850 = vmatprep.subr.mxu0 0.0
  %851 = vmatpush1.msra.mxu0 0.0
  %852 = vmatprep.subr.mxu0 0.0
  %853 = vmatpush1.msra.mxu0 0.0
  %854 = vmatprep.subr.mxu0 0.0
  %855 = vmatpush1.msra.mxu0 0.0
  %856 = vmatprep.subr.mxu0 0.0
  %857 = vmatpush1.msra.mxu0 0.0
  %858 = vmatprep.subr.mxu0 0.0
  %859 = vmatpush1.msra.mxu0 0.0
  %860 = vmatprep.subr.mxu0 0.0
  %861 = vmatpush1.msra.mxu0 0.0
  %862 = vmatprep.subr.mxu0 0.0
  %863 = vmatpush1.msra.mxu0 0.0
  %864 = vmatprep.subr.mxu0 0.0
  %865 = vmatpush1.msra.mxu0 0.0
  %866 = vmatprep.subr.mxu0 0.0
  %867 = vmatpush1.msra.mxu0 0.0
  %868 = vmatprep.subr.mxu0 0.0
  %869 = vmatpush1.msra.mxu0 0.0
  %870 = vmatprep.subr.mxu0 0.0
  %871 = vmatpush1.msra.mxu0 0.0
  %872 = vmatprep.subr.mxu0 0.0
  %873 = vmatpush1.msra.mxu0 0.0
  %874 = vmatprep.subr.mxu0 0.0
  %875 = vmatpush1.msra.mxu0 0.0
  %876 = vmatprep.subr.mxu0 0.0
  %877 = vmatpush1.msra.mxu0 0.0
  %878 = vmatprep.subr.mxu0 0.0
  %879 = vmatpush1.msra.mxu0 0.0
  %880 = vmatprep.subr.mxu0 0.0
  %881 = vmatpush1.msra.mxu0 0.0
  %882 = vmatprep.subr.mxu0 0.0
  %883 = vmatpush1.msra.mxu0 0.0
  %884 = vmatprep.subr.mxu0 0.0
  %885 = vmatpush1.msra.mxu0 0.0
  %886 = vmatprep.subr.mxu0 0.0
  %887 = vmatpush1.msra.mxu0 0.0
  %888 = vmatprep.subr.mxu0 0.0
  %889 = vmatpush1.msra.mxu0 0.0
  %890 = vmatprep.mubr.f32.mxu0 0.0
  %891 = vmatmul.mubr.f32.gmra.mrb[0].mxu0 %v653
  %v892 = vpop.f32.mrb[0].mxu0
  %v893 = vadd.f32 0.0, %v892
  %v894 = vpop.f32.mrb[0].mxu0
  %895 = vdwg.mxu0
  %v896 = vadd.f32 %v825, %v893
  %v897 = vxor.u32 %v896, 2147483648
  %v898 = vmul.f32 %v897, 1.442695
  %v899 = vpow.pop %v898
  %v900 = vadd.f32 %v899, 1.0
  %v901 = vrcp.pop %v900
  %v902 = vmul.f32 1.0, %v901
  %v903 = vtanh.pop %v896
  %v904 = vmul.f32 %v902, %v643
  %906 = vrot.lane.b32.xlu0 %v903, 32
  %v907 = vpop.permute.xlu0 %906
  %v909 = vmul.f32 %v902, %v907
  %911 = vrot.lane.b32.xlu0 %v909, 32
  %v912 = vpop.permute.xlu0 %911
  %v914 = vadd.f32 %v904, %v912
  %v915 = vtanh.pop %v914
  %917 = vrot.lane.b32.xlu0 %v915, 32
  %v918 = vpop.permute.xlu0 %917
  %v920 = vmul.f32 %v902, %v918
  %922 = vrot.lane.b32.xlu0 %v920, 64
  %v923 = vpop.permute.xlu0 %922
  %v924 = vsel %vm53, %v923, 0
  %926 = vmatprep.subr.mxu0 0.0
  %927 = vmatpush1.msra.mxu0 %v195
  %928 = vmatprep.subr.mxu0 0.0
  %929 = vmatpush1.msra.mxu0 %v196
  %930 = vmatprep.subr.mxu0 0.0
  %931 = vmatpush1.msra.mxu0 %v197
  %932 = vmatprep.subr.mxu0 0.0
  %933 = vmatpush1.msra.mxu0 %v198
  %934 = vmatprep.subr.mxu0 0.0
  %935 = vmatpush1.msra.mxu0 0.0
  %936 = vmatprep.subr.mxu0 0.0
  %937 = vmatpush1.msra.mxu0 0.0
  %938 = vmatprep.subr.mxu0 0.0
  %939 = vmatpush1.msra.mxu0 0.0
  %940 = vmatprep.subr.mxu0 0.0
  %941 = vmatpush1.msra.mxu0 0.0
  %942 = vmatprep.subr.mxu0 0.0
  %943 = vmatpush1.msra.mxu0 0.0
  %944 = vmatprep.subr.mxu0 0.0
  %945 = vmatpush1.msra.mxu0 0.0
  %946 = vmatprep.subr.mxu0 0.0
  %947 = vmatpush1.msra.mxu0 0.0
  %948 = vmatprep.subr.mxu0 0.0
  %949 = vmatpush1.msra.mxu0 0.0
  %950 = vmatprep.subr.mxu0 0.0
  %951 = vmatpush1.msra.mxu0 0.0
  %952 = vmatprep.subr.mxu0 0.0
  %953 = vmatpush1.msra.mxu0 0.0
  %954 = vmatprep.subr.mxu0 0.0
  %955 = vmatpush1.msra.mxu0 0.0
  %956 = vmatprep.subr.mxu0 0.0
  %957 = vmatpush1.msra.mxu0 0.0
  %958 = vmatprep.subr.mxu0 0.0
  %959 = vmatpush1.msra.mxu0 0.0
  %960 = vmatprep.subr.mxu0 0.0
  %961 = vmatpush1.msra.mxu0 0.0
  %962 = vmatprep.subr.mxu0 0.0
  %963 = vmatpush1.msra.mxu0 0.0
  %964 = vmatprep.subr.mxu0 0.0
  %965 = vmatpush1.msra.mxu0 0.0
  %966 = vmatprep.subr.mxu0 0.0
  %967 = vmatpush1.msra.mxu0 0.0
  %968 = vmatprep.subr.mxu0 0.0
  %969 = vmatpush1.msra.mxu0 0.0
  %970 = vmatprep.subr.mxu0 0.0
  %971 = vmatpush1.msra.mxu0 0.0
  %972 = vmatprep.subr.mxu0 0.0
  %973 = vmatpush1.msra.mxu0 0.0
  %974 = vmatprep.subr.mxu0 0.0
  %975 = vmatpush1.msra.mxu0 0.0
  %976 = vmatprep.subr.mxu0 0.0
  %977 = vmatpush1.msra.mxu0 0.0
  %978 = vmatprep.subr.mxu0 0.0
  %979 = vmatpush1.msra.mxu0 0.0
  %980 = vmatprep.subr.mxu0 0.0
  %981 = vmatpush1.msra.mxu0 0.0
  %982 = vmatprep.subr.mxu0 0.0
  %983 = vmatpush1.msra.mxu0 0.0
  %984 = vmatprep.subr.mxu0 0.0
  %985 = vmatpush1.msra.mxu0 0.0
  %986 = vmatprep.subr.mxu0 0.0
  %987 = vmatpush1.msra.mxu0 0.0
  %988 = vmatprep.subr.mxu0 0.0
  %989 = vmatpush1.msra.mxu0 0.0
  %990 = vmatprep.mubr.f32.mxu0 0.0
  %991 = vmatmul.mubr.f32.gmra.mrb[0].mxu0 %v924
  %v992 = vpop.f32.mrb[0].mxu0
  %v993 = vadd.f32 0.0, %v992
  %v994 = vpop.f32.mrb[0].mxu0
  %995 = vdwg.mxu0
  %v996 = vadd.f32 %v822, %v993
  %v997 = vxor.u32 %v996, 2147483648
  %v998 = vmul.f32 %v997, 1.442695
  %v999 = vpow.pop %v998
  %v1000 = vadd.f32 %v999, 1.0
  %v1001 = vrcp.pop %v1000
  %v1002 = vmul.f32 1.0, %v1001
  %v1003 = vtanh.pop %v996
  %v1004 = vmul.f32 %v1002, %v743
  %1006 = vrot.lane.b32.xlu0 %v1003, 32
  %v1007 = vpop.permute.xlu0 %1006
  %v1009 = vmul.f32 %v1002, %v1007
  %1011 = vrot.lane.b32.xlu0 %v1009, 32
  %v1012 = vpop.permute.xlu0 %1011
  %v1014 = vadd.f32 %v1004, %v1012
  %v1015 = vtanh.pop %v1014
  %1017 = vrot.lane.b32.xlu0 %v1015, 32
  %v1018 = vpop.permute.xlu0 %1017
  %v1020 = vmul.f32 %v1002, %v1018
  %1022 = vrot.lane.b32.xlu0 %v1020, 64
  %v1023 = vpop.permute.xlu0 %1022
  %v1024 = vsel %vm53, %v1023, 0
  %1026 = vmatprep.subr.mxu0 0.0
  %1027 = vmatpush1.msra.mxu0 %v199
  %1028 = vmatprep.subr.mxu0 0.0
  %1029 = vmatpush1.msra.mxu0 %v200
  %1030 = vmatprep.subr.mxu0 0.0
  %1031 = vmatpush1.msra.mxu0 %v201
  %1032 = vmatprep.subr.mxu0 0.0
  %1033 = vmatpush1.msra.mxu0 %v202
  %1034 = vmatprep.subr.mxu0 0.0
  %1035 = vmatpush1.msra.mxu0 0.0
  %1036 = vmatprep.subr.mxu0 0.0
  %1037 = vmatpush1.msra.mxu0 0.0
  %1038 = vmatprep.subr.mxu0 0.0
  %1039 = vmatpush1.msra.mxu0 0.0
  %1040 = vmatprep.subr.mxu0 0.0
  %1041 = vmatpush1.msra.mxu0 0.0
  %1042 = vmatprep.subr.mxu0 0.0
  %1043 = vmatpush1.msra.mxu0 0.0
  %1044 = vmatprep.subr.mxu0 0.0
  %1045 = vmatpush1.msra.mxu0 0.0
  %1046 = vmatprep.subr.mxu0 0.0
  %1047 = vmatpush1.msra.mxu0 0.0
  %1048 = vmatprep.subr.mxu0 0.0
  %1049 = vmatpush1.msra.mxu0 0.0
  %1050 = vmatprep.subr.mxu0 0.0
  %1051 = vmatpush1.msra.mxu0 0.0
  %1052 = vmatprep.subr.mxu0 0.0
  %1053 = vmatpush1.msra.mxu0 0.0
  %1054 = vmatprep.subr.mxu0 0.0
  %1055 = vmatpush1.msra.mxu0 0.0
  %1056 = vmatprep.subr.mxu0 0.0
  %1057 = vmatpush1.msra.mxu0 0.0
  %1058 = vmatprep.subr.mxu0 0.0
  %1059 = vmatpush1.msra.mxu0 0.0
  %1060 = vmatprep.subr.mxu0 0.0
  %1061 = vmatpush1.msra.mxu0 0.0
  %1062 = vmatprep.subr.mxu0 0.0
  %1063 = vmatpush1.msra.mxu0 0.0
  %1064 = vmatprep.subr.mxu0 0.0
  %1065 = vmatpush1.msra.mxu0 0.0
  %1066 = vmatprep.subr.mxu0 0.0
  %1067 = vmatpush1.msra.mxu0 0.0
  %1068 = vmatprep.subr.mxu0 0.0
  %1069 = vmatpush1.msra.mxu0 0.0
  %1070 = vmatprep.subr.mxu0 0.0
  %1071 = vmatpush1.msra.mxu0 0.0
  %1072 = vmatprep.subr.mxu0 0.0
  %1073 = vmatpush1.msra.mxu0 0.0
  %1074 = vmatprep.subr.mxu0 0.0
  %1075 = vmatpush1.msra.mxu0 0.0
  %1076 = vmatprep.subr.mxu0 0.0
  %1077 = vmatpush1.msra.mxu0 0.0
  %1078 = vmatprep.subr.mxu0 0.0
  %1079 = vmatpush1.msra.mxu0 0.0
  %1080 = vmatprep.subr.mxu0 0.0
  %1081 = vmatpush1.msra.mxu0 0.0
  %1082 = vmatprep.subr.mxu0 0.0
  %1083 = vmatpush1.msra.mxu0 0.0
  %1084 = vmatprep.subr.mxu0 0.0
  %1085 = vmatpush1.msra.mxu0 0.0
  %1086 = vmatprep.subr.mxu0 0.0
  %1087 = vmatpush1.msra.mxu0 0.0
  %1088 = vmatprep.subr.mxu0 0.0
  %1089 = vmatpush1.msra.mxu0 0.0
  %1090 = vmatprep.mubr.f32.mxu0 0.0
  %1091 = vmatmul.mubr.f32.gmra.mrb[0].mxu0 %v1024
  %v1092 = vpop.f32.mrb[0].mxu0
  %v1093 = vadd.f32 %v208, %v1092
  %v1094 = vpop.f32.mrb[0].mxu0
  %1095 = vdwg.mxu0
  %v1096 = vld [vmem:[#allocation2 + $0x18] sm:$0xff]
  %1097 = vmatprep.subr.mxu0 0.0
  %1098 = vmatpush1.msra.mxu0 %v191
  %1099 = vmatprep.subr.mxu0 0.0
  %1100 = vmatpush1.msra.mxu0 %v192
  %1101 = vmatprep.subr.mxu0 0.0
  %1102 = vmatpush1.msra.mxu0 %v193
  %1103 = vmatprep.subr.mxu0 0.0
  %1104 = vmatpush1.msra.mxu0 %v194
  %1105 = vmatprep.subr.mxu0 0.0
  %1106 = vmatpush1.msra.mxu0 0.0
  %1107 = vmatprep.subr.mxu0 0.0
  %1108 = vmatpush1.msra.mxu0 0.0
  %1109 = vmatprep.subr.mxu0 0.0
  %1110 = vmatpush1.msra.mxu0 0.0
  %1111 = vmatprep.subr.mxu0 0.0
  %1112 = vmatpush1.msra.mxu0 0.0
  %1113 = vmatprep.subr.mxu0 0.0
  %1114 = vmatpush1.msra.mxu0 0.0
  %1115 = vmatprep.subr.mxu0 0.0
  %1116 = vmatpush1.msra.mxu0 0.0
  %1117 = vmatprep.subr.mxu0 0.0
  %1118 = vmatpush1.msra.mxu0 0.0
  %1119 = vmatprep.subr.mxu0 0.0
  %1120 = vmatpush1.msra.mxu0 0.0
  %1121 = vmatprep.subr.mxu0 0.0
  %1122 = vmatpush1.msra.mxu0 0.0
  %1123 = vmatprep.subr.mxu0 0.0
  %1124 = vmatpush1.msra.mxu0 0.0
  %1125 = vmatprep.subr.mxu0 0.0
  %1126 = vmatpush1.msra.mxu0 0.0
  %1127 = vmatprep.subr.mxu0 0.0
  %1128 = vmatpush1.msra.mxu0 0.0
  %1129 = vmatprep.subr.mxu0 0.0
  %1130 = vmatpush1.msra.mxu0 0.0
  %1131 = vmatprep.subr.mxu0 0.0
  %1132 = vmatpush1.msra.mxu0 0.0
  %1133 = vmatprep.subr.mxu0 0.0
  %1134 = vmatpush1.msra.mxu0 0.0
  %1135 = vmatprep.subr.mxu0 0.0
  %1136 = vmatpush1.msra.mxu0 0.0
  %1137 = vmatprep.subr.mxu0 0.0
  %1138 = vmatpush1.msra.mxu0 0.0
  %1139 = vmatprep.subr.mxu0 0.0
  %1140 = vmatpush1.msra.mxu0 0.0
  %1141 = vmatprep.subr.mxu0 0.0
  %1142 = vmatpush1.msra.mxu0 0.0
  %1143 = vmatprep.subr.mxu0 0.0
  %1144 = vmatpush1.msra.mxu0 0.0
  %1145 = vmatprep.subr.mxu0 0.0
  %1146 = vmatpush1.msra.mxu0 0.0
  %1147 = vmatprep.subr.mxu0 0.0
  %1148 = vmatpush1.msra.mxu0 0.0
  %1149 = vmatprep.subr.mxu0 0.0
  %1150 = vmatpush1.msra.mxu0 0.0
  %1151 = vmatprep.subr.mxu0 0.0
  %1152 = vmatpush1.msra.mxu0 0.0
  %1153 = vmatprep.subr.mxu0 0.0
  %1154 = vmatpush1.msra.mxu0 0.0
  %1155 = vmatprep.subr.mxu0 0.0
  %1156 = vmatpush1.msra.mxu0 0.0
  %1157 = vmatprep.subr.mxu0 0.0
  %1158 = vmatpush1.msra.mxu0 0.0
  %1159 = vmatprep.subr.mxu0 0.0
  %1160 = vmatpush1.msra.mxu0 0.0
  %1161 = vmatprep.mubr.f32.mxu0 0.0
  %1162 = vmatmul.mubr.f32.gmra.mrb[0].mxu0 %v924
  %v1163 = vpop.f32.mrb[0].mxu0
  %v1164 = vadd.f32 0.0, %v1163
  %v1165 = vpop.f32.mrb[0].mxu0
  %1166 = vdwg.mxu0
  %v1167 = vadd.f32 %v1096, %v1164
  %v1168 = vxor.u32 %v1167, 2147483648
  %v1169 = vmul.f32 %v1168, 1.442695
  %v1170 = vpow.pop %v1169
  %v1171 = vadd.f32 %v1170, 1.0
  %v1172 = vrcp.pop %v1171
  %v1173 = vmul.f32 1.0, %v1172
  %v1174 = vtanh.pop %v1167
  %v1175 = vmul.f32 %v1173, %v914
  %1177 = vrot.lane.b32.xlu0 %v1174, 32
  %v1178 = vpop.permute.xlu0 %1177
  %v1180 = vmul.f32 %v1173, %v1178
  %1182 = vrot.lane.b32.xlu0 %v1180, 32
  %v1183 = vpop.permute.xlu0 %1182
  %v1185 = vadd.f32 %v1175, %v1183
  %v1186 = vtanh.pop %v1185
  %1188 = vrot.lane.b32.xlu0 %v1186, 32
  %v1189 = vpop.permute.xlu0 %1188
  %v1191 = vmul.f32 %v1173, %v1189
  %1193 = vrot.lane.b32.xlu0 %v1191, 64
  %v1194 = vpop.permute.xlu0 %1193
  %v1195 = vsel %vm53, %v1194, 0
  %1197 = vmatprep.subr.mxu0 0.0
  %1198 = vmatpush1.msra.mxu0 %v195
  %1199 = vmatprep.subr.mxu0 0.0
  %1200 = vmatpush1.msra.mxu0 %v196
  %1201 = vmatprep.subr.mxu0 0.0
  %1202 = vmatpush1.msra.mxu0 %v197
  %1203 = vmatprep.subr.mxu0 0.0
  %1204 = vmatpush1.msra.mxu0 %v198
  %1205 = vmatprep.subr.mxu0 0.0
  %1206 = vmatpush1.msra.mxu0 0.0
  %1207 = vmatprep.subr.mxu0 0.0
  %1208 = vmatpush1.msra.mxu0 0.0
  %1209 = vmatprep.subr.mxu0 0.0
  %1210 = vmatpush1.msra.mxu0 0.0
  %1211 = vmatprep.subr.mxu0 0.0
  %1212 = vmatpush1.msra.mxu0 0.0
  %1213 = vmatprep.subr.mxu0 0.0
  %1214 = vmatpush1.msra.mxu0 0.0
  %1215 = vmatprep.subr.mxu0 0.0
  %1216 = vmatpush1.msra.mxu0 0.0
  %1217 = vmatprep.subr.mxu0 0.0
  %1218 = vmatpush1.msra.mxu0 0.0
  %1219 = vmatprep.subr.mxu0 0.0
  %1220 = vmatpush1.msra.mxu0 0.0
  %1221 = vmatprep.subr.mxu0 0.0
  %1222 = vmatpush1.msra.mxu0 0.0
  %1223 = vmatprep.subr.mxu0 0.0
  %1224 = vmatpush1.msra.mxu0 0.0
  %1225 = vmatprep.subr.mxu0 0.0
  %1226 = vmatpush1.msra.mxu0 0.0
  %1227 = vmatprep.subr.mxu0 0.0
  %1228 = vmatpush1.msra.mxu0 0.0
  %1229 = vmatprep.subr.mxu0 0.0
  %1230 = vmatpush1.msra.mxu0 0.0
  %1231 = vmatprep.subr.mxu0 0.0
  %1232 = vmatpush1.msra.mxu0 0.0
  %1233 = vmatprep.subr.mxu0 0.0
  %1234 = vmatpush1.msra.mxu0 0.0
  %1235 = vmatprep.subr.mxu0 0.0
  %1236 = vmatpush1.msra.mxu0 0.0
  %1237 = vmatprep.subr.mxu0 0.0
  %1238 = vmatpush1.msra.mxu0 0.0
  %1239 = vmatprep.subr.mxu0 0.0
  %1240 = vmatpush1.msra.mxu0 0.0
  %1241 = vmatprep.subr.mxu0 0.0
  %1242 = vmatpush1.msra.mxu0 0.0
  %1243 = vmatprep.subr.mxu0 0.0
  %1244 = vmatpush1.msra.mxu0 0.0
  %1245 = vmatprep.subr.mxu0 0.0
  %1246 = vmatpush1.msra.mxu0 0.0
  %1247 = vmatprep.subr.mxu0 0.0
  %1248 = vmatpush1.msra.mxu0 0.0
  %1249 = vmatprep.subr.mxu0 0.0
  %1250 = vmatpush1.msra.mxu0 0.0
  %1251 = vmatprep.subr.mxu0 0.0
  %1252 = vmatpush1.msra.mxu0 0.0
  %1253 = vmatprep.subr.mxu0 0.0
  %1254 = vmatpush1.msra.mxu0 0.0
  %1255 = vmatprep.subr.mxu0 0.0
  %1256 = vmatpush1.msra.mxu0 0.0
  %1257 = vmatprep.subr.mxu0 0.0
  %1258 = vmatpush1.msra.mxu0 0.0
  %1259 = vmatprep.subr.mxu0 0.0
  %1260 = vmatpush1.msra.mxu0 0.0
  %1261 = vmatprep.mubr.f32.mxu0 0.0
  %1262 = vmatmul.mubr.f32.gmra.mrb[0].mxu0 %v1195
  %v1263 = vpop.f32.mrb[0].mxu0
  %v1264 = vadd.f32 0.0, %v1263
  %v1265 = vpop.f32.mrb[0].mxu0
  %1266 = vdwg.mxu0
  %v1267 = vadd.f32 %v1093, %v1264
  %v1268 = vxor.u32 %v1267, 2147483648
  %v1269 = vmul.f32 %v1268, 1.442695
  %v1270 = vpow.pop %v1269
  %v1271 = vadd.f32 %v1270, 1.0
  %v1272 = vrcp.pop %v1271
  %v1273 = vmul.f32 1.0, %v1272
  %v1274 = vtanh.pop %v1267
  %v1275 = vmul.f32 %v1273, %v1014
  %1277 = vrot.lane.b32.xlu0 %v1274, 32
  %v1278 = vpop.permute.xlu0 %1277
  %v1280 = vmul.f32 %v1273, %v1278
  %1282 = vrot.lane.b32.xlu0 %v1280, 32
  %v1283 = vpop.permute.xlu0 %1282
  %v1285 = vadd.f32 %v1275, %v1283
  %v1286 = vtanh.pop %v1285
  %1288 = vrot.lane.b32.xlu0 %v1286, 32
  %v1289 = vpop.permute.xlu0 %1288
  %v1291 = vmul.f32 %v1273, %v1289
  %1293 = vrot.lane.b32.xlu0 %v1291, 64
  %v1294 = vpop.permute.xlu0 %1293
  %v1295 = vsel %vm53, %v1294, 0
  %1297 = vmatprep.subr.mxu0 0.0
  %1298 = vmatpush1.msra.mxu0 %v199
  %1299 = vmatprep.subr.mxu0 0.0
  %1300 = vmatpush1.msra.mxu0 %v200
  %1301 = vmatprep.subr.mxu0 0.0
  %1302 = vmatpush1.msra.mxu0 %v201
  %1303 = vmatprep.subr.mxu0 0.0
  %1304 = vmatpush1.msra.mxu0 %v202
  %1305 = vmatprep.subr.mxu0 0.0
  %1306 = vmatpush1.msra.mxu0 0.0
  %1307 = vmatprep.subr.mxu0 0.0
  %1308 = vmatpush1.msra.mxu0 0.0
  %1309 = vmatprep.subr.mxu0 0.0
  %1310 = vmatpush1.msra.mxu0 0.0
  %1311 = vmatprep.subr.mxu0 0.0
  %1312 = vmatpush1.msra.mxu0 0.0
  %1313 = vmatprep.subr.mxu0 0.0
  %1314 = vmatpush1.msra.mxu0 0.0
  %1315 = vmatprep.subr.mxu0 0.0
  %1316 = vmatpush1.msra.mxu0 0.0
  %1317 = vmatprep.subr.mxu0 0.0
  %1318 = vmatpush1.msra.mxu0 0.0
  %1319 = vmatprep.subr.mxu0 0.0
  %1320 = vmatpush1.msra.mxu0 0.0
  %1321 = vmatprep.subr.mxu0 0.0
  %1322 = vmatpush1.msra.mxu0 0.0
  %1323 = vmatprep.subr.mxu0 0.0
  %1324 = vmatpush1.msra.mxu0 0.0
  %1325 = vmatprep.subr.mxu0 0.0
  %1326 = vmatpush1.msra.mxu0 0.0
  %1327 = vmatprep.subr.mxu0 0.0
  %1328 = vmatpush1.msra.mxu0 0.0
  %1329 = vmatprep.subr.mxu0 0.0
  %1330 = vmatpush1.msra.mxu0 0.0
  %1331 = vmatprep.subr.mxu0 0.0
  %1332 = vmatpush1.msra.mxu0 0.0
  %1333 = vmatprep.subr.mxu0 0.0
  %1334 = vmatpush1.msra.mxu0 0.0
  %1335 = vmatprep.subr.mxu0 0.0
  %1336 = vmatpush1.msra.mxu0 0.0
  %1337 = vmatprep.subr.mxu0 0.0
  %1338 = vmatpush1.msra.mxu0 0.0
  %1339 = vmatprep.subr.mxu0 0.0
  %1340 = vmatpush1.msra.mxu0 0.0
  %1341 = vmatprep.subr.mxu0 0.0
  %1342 = vmatpush1.msra.mxu0 0.0
  %1343 = vmatprep.subr.mxu0 0.0
  %1344 = vmatpush1.msra.mxu0 0.0
  %1345 = vmatprep.subr.mxu0 0.0
  %1346 = vmatpush1.msra.mxu0 0.0
  %1347 = vmatprep.subr.mxu0 0.0
  %1348 = vmatpush1.msra.mxu0 0.0
  %1349 = vmatprep.subr.mxu0 0.0
  %1350 = vmatpush1.msra.mxu0 0.0
  %1351 = vmatprep.subr.mxu0 0.0
  %1352 = vmatpush1.msra.mxu0 0.0
  %1353 = vmatprep.subr.mxu0 0.0
  %1354 = vmatpush1.msra.mxu0 0.0
  %1355 = vmatprep.subr.mxu0 0.0
  %1356 = vmatpush1.msra.mxu0 0.0
  %1357 = vmatprep.subr.mxu0 0.0
  %1358 = vmatpush1.msra.mxu0 0.0
  %1359 = vmatprep.subr.mxu0 0.0
  %1360 = vmatpush1.msra.mxu0 0.0
  %1361 = vmatprep.mubr.f32.mxu0 0.0
  %1362 = vmatmul.mubr.f32.gmra.mrb[0].mxu0 %v1295
  %v1363 = vpop.f32.mrb[0].mxu0
  %v1364 = vadd.f32 %v208, %v1363
  %v1365 = vpop.f32.mrb[0].mxu0
  %1366 = vdwg.mxu0
  %v1367 = vld [vmem:[#allocation2 + $0x20] sm:$0xff]
  %1368 = vmatprep.subr.mxu0 0.0
  %1369 = vmatpush1.msra.mxu0 %v191
  %1370 = vmatprep.subr.mxu0 0.0
  %1371 = vmatpush1.msra.mxu0 %v192
  %1372 = vmatprep.subr.mxu0 0.0
  %1373 = vmatpush1.msra.mxu0 %v193
  %1374 = vmatprep.subr.mxu0 0.0
  %1375 = vmatpush1.msra.mxu0 %v194
  %1376 = vmatprep.subr.mxu0 0.0
  %1377 = vmatpush1.msra.mxu0 0.0
  %1378 = vmatprep.subr.mxu0 0.0
  %1379 = vmatpush1.msra.mxu0 0.0
  %1380 = vmatprep.subr.mxu0 0.0
  %1381 = vmatpush1.msra.mxu0 0.0
  %1382 = vmatprep.subr.mxu0 0.0
  %1383 = vmatpush1.msra.mxu0 0.0
  %1384 = vmatprep.subr.mxu0 0.0
  %1385 = vmatpush1.msra.mxu0 0.0
  %1386 = vmatprep.subr.mxu0 0.0
  %1387 = vmatpush1.msra.mxu0 0.0
  %1388 = vmatprep.subr.mxu0 0.0
  %1389 = vmatpush1.msra.mxu0 0.0
  %1390 = vmatprep.subr.mxu0 0.0
  %1391 = vmatpush1.msra.mxu0 0.0
  %1392 = vmatprep.subr.mxu0 0.0
  %1393 = vmatpush1.msra.mxu0 0.0
  %1394 = vmatprep.subr.mxu0 0.0
  %1395 = vmatpush1.msra.mxu0 0.0
  %1396 = vmatprep.subr.mxu0 0.0
  %1397 = vmatpush1.msra.mxu0 0.0
  %1398 = vmatprep.subr.mxu0 0.0
  %1399 = vmatpush1.msra.mxu0 0.0
  %1400 = vmatprep.subr.mxu0 0.0
  %1401 = vmatpush1.msra.mxu0 0.0
  %1402 = vmatprep.subr.mxu0 0.0
  %1403 = vmatpush1.msra.mxu0 0.0
  %1404 = vmatprep.subr.mxu0 0.0
  %1405 = vmatpush1.msra.mxu0 0.0
  %1406 = vmatprep.subr.mxu0 0.0
  %1407 = vmatpush1.msra.mxu0 0.0
  %1408 = vmatprep.subr.mxu0 0.0
  %1409 = vmatpush1.msra.mxu0 0.0
  %1410 = vmatprep.subr.mxu0 0.0
  %1411 = vmatpush1.msra.mxu0 0.0
  %1412 = vmatprep.subr.mxu0 0.0
  %1413 = vmatpush1.msra.mxu0 0.0
  %1414 = vmatprep.subr.mxu0 0.0
  %1415 = vmatpush1.msra.mxu0 0.0
  %1416 = vmatprep.subr.mxu0 0.0
  %1417 = vmatpush1.msra.mxu0 0.0
  %1418 = vmatprep.subr.mxu0 0.0
  %1419 = vmatpush1.msra.mxu0 0.0
  %1420 = vmatprep.subr.mxu0 0.0
  %1421 = vmatpush1.msra.mxu0 0.0
  %1422 = vmatprep.subr.mxu0 0.0
  %1423 = vmatpush1.msra.mxu0 0.0
  %1424 = vmatprep.subr.mxu0 0.0
  %1425 = vmatpush1.msra.mxu0 0.0
  %1426 = vmatprep.subr.mxu0 0.0
  %1427 = vmatpush1.msra.mxu0 0.0
  %1428 = vmatprep.subr.mxu0 0.0
  %1429 = vmatpush1.msra.mxu0 0.0
  %1430 = vmatprep.subr.mxu0 0.0
  %1431 = vmatpush1.msra.mxu0 0.0
  %1432 = vmatprep.mubr.f32.mxu0 0.0
  %1433 = vmatmul.mubr.f32.gmra.mrb[0].mxu0 %v1195
  %v1434 = vpop.f32.mrb[0].mxu0
  %v1435 = vadd.f32 0.0, %v1434
  %v1436 = vpop.f32.mrb[0].mxu0
  %1437 = vdwg.mxu0
  %v1438 = vadd.f32 %v1367, %v1435
  %v1439 = vxor.u32 %v1438, 2147483648
  %v1440 = vmul.f32 %v1439, 1.442695
  %v1441 = vpow.pop %v1440
  %v1442 = vadd.f32 %v1441, 1.0
  %v1443 = vrcp.pop %v1442
  %v1444 = vmul.f32 1.0, %v1443
  %v1445 = vtanh.pop %v1438
  %v1446 = vmul.f32 %v1444, %v1185
  %1448 = vrot.lane.b32.xlu0 %v1445, 32
  %v1449 = vpop.permute.xlu0 %1448
  %v1451 = vmul.f32 %v1444, %v1449
  %1453 = vrot.lane.b32.xlu0 %v1451, 32
  %v1454 = vpop.permute.xlu0 %1453
  %v1456 = vadd.f32 %v1446, %v1454
  %v1457 = vtanh.pop %v1456
  %1459 = vrot.lane.b32.xlu0 %v1457, 32
  %v1460 = vpop.permute.xlu0 %1459
  %v1462 = vmul.f32 %v1444, %v1460
  %1464 = vrot.lane.b32.xlu0 %v1462, 64
  %v1465 = vpop.permute.xlu0 %1464
  %v1466 = vsel %vm53, %v1465, 0
  %1468 = vmatprep.subr.mxu0 0.0
  %1469 = vmatpush1.msra.mxu0 %v195
  %1470 = vmatprep.subr.mxu0 0.0
  %1471 = vmatpush1.msra.mxu0 %v196
  %1472 = vmatprep.subr.mxu0 0.0
  %1473 = vmatpush1.msra.mxu0 %v197
  %1474 = vmatprep.subr.mxu0 0.0
  %1475 = vmatpush1.msra.mxu0 %v198
  %1476 = vmatprep.subr.mxu0 0.0
  %1477 = vmatpush1.msra.mxu0 0.0
  %1478 = vmatprep.subr.mxu0 0.0
  %1479 = vmatpush1.msra.mxu0 0.0
  %1480 = vmatprep.subr.mxu0 0.0
  %1481 = vmatpush1.msra.mxu0 0.0
  %1482 = vmatprep.subr.mxu0 0.0
  %1483 = vmatpush1.msra.mxu0 0.0
  %1484 = vmatprep.subr.mxu0 0.0
  %1485 = vmatpush1.msra.mxu0 0.0
  %1486 = vmatprep.subr.mxu0 0.0
  %1487 = vmatpush1.msra.mxu0 0.0
  %1488 = vmatprep.subr.mxu0 0.0
  %1489 = vmatpush1.msra.mxu0 0.0
  %1490 = vmatprep.subr.mxu0 0.0
  %1491 = vmatpush1.msra.mxu0 0.0
  %1492 = vmatprep.subr.mxu0 0.0
  %1493 = vmatpush1.msra.mxu0 0.0
  %1494 = vmatprep.subr.mxu0 0.0
  %1495 = vmatpush1.msra.mxu0 0.0
  %1496 = vmatprep.subr.mxu0 0.0
  %1497 = vmatpush1.msra.mxu0 0.0
  %1498 = vmatprep.subr.mxu0 0.0
  %1499 = vmatpush1.msra.mxu0 0.0
  %1500 = vmatprep.subr.mxu0 0.0
  %1501 = vmatpush1.msra.mxu0 0.0
  %1502 = vmatprep.subr.mxu0 0.0
  %1503 = vmatpush1.msra.mxu0 0.0
  %1504 = vmatprep.subr.mxu0 0.0
  %1505 = vmatpush1.msra.mxu0 0.0
  %1506 = vmatprep.subr.mxu0 0.0
  %1507 = vmatpush1.msra.mxu0 0.0
  %1508 = vmatprep.subr.mxu0 0.0
  %1509 = vmatpush1.msra.mxu0 0.0
  %1510 = vmatprep.subr.mxu0 0.0
  %1511 = vmatpush1.msra.mxu0 0.0
  %1512 = vmatprep.subr.mxu0 0.0
  %1513 = vmatpush1.msra.mxu0 0.0
  %1514 = vmatprep.subr.mxu0 0.0
  %1515 = vmatpush1.msra.mxu0 0.0
  %1516 = vmatprep.subr.mxu0 0.0
  %1517 = vmatpush1.msra.mxu0 0.0
  %1518 = vmatprep.subr.mxu0 0.0
  %1519 = vmatpush1.msra.mxu0 0.0
  %1520 = vmatprep.subr.mxu0 0.0
  %1521 = vmatpush1.msra.mxu0 0.0
  %1522 = vmatprep.subr.mxu0 0.0
  %1523 = vmatpush1.msra.mxu0 0.0
  %1524 = vmatprep.subr.mxu0 0.0
  %1525 = vmatpush1.msra.mxu0 0.0
  %1526 = vmatprep.subr.mxu0 0.0
  %1527 = vmatpush1.msra.mxu0 0.0
  %1528 = vmatprep.subr.mxu0 0.0
  %1529 = vmatpush1.msra.mxu0 0.0
  %1530 = vmatprep.subr.mxu0 0.0
  %1531 = vmatpush1.msra.mxu0 0.0
  %1532 = vmatprep.mubr.f32.mxu0 0.0
  %1533 = vmatmul.mubr.f32.gmra.mrb[0].mxu0 %v1466
  %v1534 = vpop.f32.mrb[0].mxu0
  %v1535 = vadd.f32 0.0, %v1534
  %v1536 = vpop.f32.mrb[0].mxu0
  %1537 = vdwg.mxu0
  %v1538 = vadd.f32 %v1364, %v1535
  %v1539 = vxor.u32 %v1538, 2147483648
  %v1540 = vmul.f32 %v1539, 1.442695
  %v1541 = vpow.pop %v1540
  %v1542 = vadd.f32 %v1541, 1.0
  %v1543 = vrcp.pop %v1542
  %v1544 = vmul.f32 1.0, %v1543
  %v1545 = vtanh.pop %v1538
  %v1546 = vmul.f32 %v1544, %v1285
  %1548 = vrot.lane.b32.xlu0 %v1545, 32
  %v1549 = vpop.permute.xlu0 %1548
  %v1551 = vmul.f32 %v1544, %v1549
  %1553 = vrot.lane.b32.xlu0 %v1551, 32
  %v1554 = vpop.permute.xlu0 %1553
  %v1556 = vadd.f32 %v1546, %v1554
  %v1557 = vtanh.pop %v1556
  %1559 = vrot.lane.b32.xlu0 %v1557, 32
  %v1560 = vpop.permute.xlu0 %1559
  %v1562 = vmul.f32 %v1544, %v1560
  %1564 = vrot.lane.b32.xlu0 %v1562, 64
  %v1565 = vpop.permute.xlu0 %1564
  %v1566 = vsel %vm53, %v1565, 0
  %1568 = vmatprep.subr.mxu0 0.0
  %1569 = vmatpush1.msra.mxu0 %v199
  %1570 = vmatprep.subr.mxu0 0.0
  %1571 = vmatpush1.msra.mxu0 %v200
  %1572 = vmatprep.subr.mxu0 0.0
  %1573 = vmatpush1.msra.mxu0 %v201
  %1574 = vmatprep.subr.mxu0 0.0
  %1575 = vmatpush1.msra.mxu0 %v202
  %1576 = vmatprep.subr.mxu0 0.0
  %1577 = vmatpush1.msra.mxu0 0.0
  %1578 = vmatprep.subr.mxu0 0.0
  %1579 = vmatpush1.msra.mxu0 0.0
  %1580 = vmatprep.subr.mxu0 0.0
  %1581 = vmatpush1.msra.mxu0 0.0
  %1582 = vmatprep.subr.mxu0 0.0
  %1583 = vmatpush1.msra.mxu0 0.0
  %1584 = vmatprep.subr.mxu0 0.0
  %1585 = vmatpush1.msra.mxu0 0.0
  %1586 = vmatprep.subr.mxu0 0.0
  %1587 = vmatpush1.msra.mxu0 0.0
  %1588 = vmatprep.subr.mxu0 0.0
  %1589 = vmatpush1.msra.mxu0 0.0
  %1590 = vmatprep.subr.mxu0 0.0
  %1591 = vmatpush1.msra.mxu0 0.0
  %1592 = vmatprep.subr.mxu0 0.0
  %1593 = vmatpush1.msra.mxu0 0.0
  %1594 = vmatprep.subr.mxu0 0.0
  %1595 = vmatpush1.msra.mxu0 0.0
  %1596 = vmatprep.subr.mxu0 0.0
  %1597 = vmatpush1.msra.mxu0 0.0
  %1598 = vmatprep.subr.mxu0 0.0
  %1599 = vmatpush1.msra.mxu0 0.0
  %1600 = vmatprep.subr.mxu0 0.0
  %1601 = vmatpush1.msra.mxu0 0.0
  %1602 = vmatprep.subr.mxu0 0.0
  %1603 = vmatpush1.msra.mxu0 0.0
  %1604 = vmatprep.subr.mxu0 0.0
  %1605 = vmatpush1.msra.mxu0 0.0
  %1606 = vmatprep.subr.mxu0 0.0
  %1607 = vmatpush1.msra.mxu0 0.0
  %1608 = vmatprep.subr.mxu0 0.0
  %1609 = vmatpush1.msra.mxu0 0.0
  %1610 = vmatprep.subr.mxu0 0.0
  %1611 = vmatpush1.msra.mxu0 0.0
  %1612 = vmatprep.subr.mxu0 0.0
  %1613 = vmatpush1.msra.mxu0 0.0
  %1614 = vmatprep.subr.mxu0 0.0
  %1615 = vmatpush1.msra.mxu0 0.0
  %1616 = vmatprep.subr.mxu0 0.0
  %1617 = vmatpush1.msra.mxu0 0.0
  %1618 = vmatprep.subr.mxu0 0.0
  %1619 = vmatpush1.msra.mxu0 0.0
  %1620 = vmatprep.subr.mxu0 0.0
  %1621 = vmatpush1.msra.mxu0 0.0
  %1622 = vmatprep.subr.mxu0 0.0
  %1623 = vmatpush1.msra.mxu0 0.0
  %1624 = vmatprep.subr.mxu0 0.0
  %1625 = vmatpush1.msra.mxu0 0.0
  %1626 = vmatprep.subr.mxu0 0.0
  %1627 = vmatpush1.msra.mxu0 0.0
  %1628 = vmatprep.subr.mxu0 0.0
  %1629 = vmatpush1.msra.mxu0 0.0
  %1630 = vmatprep.subr.mxu0 0.0
  %1631 = vmatpush1.msra.mxu0 0.0
  %1632 = vmatprep.mubr.f32.mxu0 0.0
  %1633 = vmatmul.mubr.f32.gmra.mrb[0].mxu0 %v1566
  %v1634 = vpop.f32.mrb[0].mxu0
  %v1635 = vadd.f32 %v208, %v1634
  %v1636 = vpop.f32.mrb[0].mxu0
  %1637 = vdwg.mxu0
  %v1638 = vld [vmem:[#allocation2 + $0x28] sm:$0xff]
  %1639 = vmatprep.subr.mxu0 0.0
  %1640 = vmatpush1.msra.mxu0 %v191
  %1641 = vmatprep.subr.mxu0 0.0
  %1642 = vmatpush1.msra.mxu0 %v192
  %1643 = vmatprep.subr.mxu0 0.0
  %1644 = vmatpush1.msra.mxu0 %v193
  %1645 = vmatprep.subr.mxu0 0.0
  %1646 = vmatpush1.msra.mxu0 %v194
  %1647 = vmatprep.subr.mxu0 0.0
  %1648 = vmatpush1.msra.mxu0 0.0
  %1649 = vmatprep.subr.mxu0 0.0
  %1650 = vmatpush1.msra.mxu0 0.0
  %1651 = vmatprep.subr.mxu0 0.0
  %1652 = vmatpush1.msra.mxu0 0.0
  %1653 = vmatprep.subr.mxu0 0.0
  %1654 = vmatpush1.msra.mxu0 0.0
  %1655 = vmatprep.subr.mxu0 0.0
  %1656 = vmatpush1.msra.mxu0 0.0
  %1657 = vmatprep.subr.mxu0 0.0
  %1658 = vmatpush1.msra.mxu0 0.0
  %1659 = vmatprep.subr.mxu0 0.0
  %1660 = vmatpush1.msra.mxu0 0.0
  %1661 = vmatprep.subr.mxu0 0.0
  %1662 = vmatpush1.msra.mxu0 0.0
  %1663 = vmatprep.subr.mxu0 0.0
  %1664 = vmatpush1.msra.mxu0 0.0
  %1665 = vmatprep.subr.mxu0 0.0
  %1666 = vmatpush1.msra.mxu0 0.0
  %1667 = vmatprep.subr.mxu0 0.0
  %1668 = vmatpush1.msra.mxu0 0.0
  %1669 = vmatprep.subr.mxu0 0.0
  %1670 = vmatpush1.msra.mxu0 0.0
  %1671 = vmatprep.subr.mxu0 0.0
  %1672 = vmatpush1.msra.mxu0 0.0
  %1673 = vmatprep.subr.mxu0 0.0
  %1674 = vmatpush1.msra.mxu0 0.0
  %1675 = vmatprep.subr.mxu0 0.0
  %1676 = vmatpush1.msra.mxu0 0.0
  %1677 = vmatprep.subr.mxu0 0.0
  %1678 = vmatpush1.msra.mxu0 0.0
  %1679 = vmatprep.subr.mxu0 0.0
  %1680 = vmatpush1.msra.mxu0 0.0
  %1681 = vmatprep.subr.mxu0 0.0
  %1682 = vmatpush1.msra.mxu0 0.0
  %1683 = vmatprep.subr.mxu0 0.0
  %1684 = vmatpush1.msra.mxu0 0.0
  %1685 = vmatprep.subr.mxu0 0.0
  %1686 = vmatpush1.msra.mxu0 0.0
  %1687 = vmatprep.subr.mxu0 0.0
  %1688 = vmatpush1.msra.mxu0 0.0
  %1689 = vmatprep.subr.mxu0 0.0
  %1690 = vmatpush1.msra.mxu0 0.0
  %1691 = vmatprep.subr.mxu0 0.0
  %1692 = vmatpush1.msra.mxu0 0.0
  %1693 = vmatprep.subr.mxu0 0.0
  %1694 = vmatpush1.msra.mxu0 0.0
  %1695 = vmatprep.subr.mxu0 0.0
  %1696 = vmatpush1.msra.mxu0 0.0
  %1697 = vmatprep.subr.mxu0 0.0
  %1698 = vmatpush1.msra.mxu0 0.0
  %1699 = vmatprep.subr.mxu0 0.0
  %1700 = vmatpush1.msra.mxu0 0.0
  %1701 = vmatprep.subr.mxu0 0.0
  %1702 = vmatpush1.msra.mxu0 0.0
  %1703 = vmatprep.mubr.f32.mxu0 0.0
  %1704 = vmatmul.mubr.f32.gmra.mrb[0].mxu0 %v1466
  %v1705 = vpop.f32.mrb[0].mxu0
  %v1706 = vadd.f32 0.0, %v1705
  %v1707 = vpop.f32.mrb[0].mxu0
  %1708 = vdwg.mxu0
  %v1709 = vadd.f32 %v1638, %v1706
  %v1710 = vxor.u32 %v1709, 2147483648
  %v1711 = vmul.f32 %v1710, 1.442695
  %v1712 = vpow.pop %v1711
  %v1713 = vadd.f32 %v1712, 1.0
  %v1714 = vrcp.pop %v1713
  %v1715 = vmul.f32 1.0, %v1714
  %v1716 = vtanh.pop %v1709
  %v1717 = vmul.f32 %v1715, %v1456
  %1719 = vrot.lane.b32.xlu0 %v1716, 32
  %v1720 = vpop.permute.xlu0 %1719
  %v1722 = vmul.f32 %v1715, %v1720
  %1724 = vrot.lane.b32.xlu0 %v1722, 32
  %v1725 = vpop.permute.xlu0 %1724
  %v1727 = vadd.f32 %v1717, %v1725
  %v1728 = vtanh.pop %v1727
  %1730 = vrot.lane.b32.xlu0 %v1728, 32
  %v1731 = vpop.permute.xlu0 %1730
  %v1733 = vmul.f32 %v1715, %v1731
  %1735 = vrot.lane.b32.xlu0 %v1733, 64
  %v1736 = vpop.permute.xlu0 %1735
  %v1737 = vsel %vm53, %v1736, 0
  %1739 = vmatprep.subr.mxu0 0.0
  %1740 = vmatpush1.msra.mxu0 %v195
  %1741 = vmatprep.subr.mxu0 0.0
  %1742 = vmatpush1.msra.mxu0 %v196
  %1743 = vmatprep.subr.mxu0 0.0
  %1744 = vmatpush1.msra.mxu0 %v197
  %1745 = vmatprep.subr.mxu0 0.0
  %1746 = vmatpush1.msra.mxu0 %v198
  %1747 = vmatprep.subr.mxu0 0.0
  %1748 = vmatpush1.msra.mxu0 0.0
  %1749 = vmatprep.subr.mxu0 0.0
  %1750 = vmatpush1.msra.mxu0 0.0
  %1751 = vmatprep.subr.mxu0 0.0
  %1752 = vmatpush1.msra.mxu0 0.0
  %1753 = vmatprep.subr.mxu0 0.0
  %1754 = vmatpush1.msra.mxu0 0.0
  %1755 = vmatprep.subr.mxu0 0.0
  %1756 = vmatpush1.msra.mxu0 0.0
  %1757 = vmatprep.subr.mxu0 0.0
  %1758 = vmatpush1.msra.mxu0 0.0
  %1759 = vmatprep.subr.mxu0 0.0
  %1760 = vmatpush1.msra.mxu0 0.0
  %1761 = vmatprep.subr.mxu0 0.0
  %1762 = vmatpush1.msra.mxu0 0.0
  %1763 = vmatprep.subr.mxu0 0.0
  %1764 = vmatpush1.msra.mxu0 0.0
  %1765 = vmatprep.subr.mxu0 0.0
  %1766 = vmatpush1.msra.mxu0 0.0
  %1767 = vmatprep.subr.mxu0 0.0
  %1768 = vmatpush1.msra.mxu0 0.0
  %1769 = vmatprep.subr.mxu0 0.0
  %1770 = vmatpush1.msra.mxu0 0.0
  %1771 = vmatprep.subr.mxu0 0.0
  %1772 = vmatpush1.msra.mxu0 0.0
  %1773 = vmatprep.subr.mxu0 0.0
  %1774 = vmatpush1.msra.mxu0 0.0
  %1775 = vmatprep.subr.mxu0 0.0
  %1776 = vmatpush1.msra.mxu0 0.0
  %1777 = vmatprep.subr.mxu0 0.0
  %1778 = vmatpush1.msra.mxu0 0.0
  %1779 = vmatprep.subr.mxu0 0.0
  %1780 = vmatpush1.msra.mxu0 0.0
  %1781 = vmatprep.subr.mxu0 0.0
  %1782 = vmatpush1.msra.mxu0 0.0
  %1783 = vmatprep.subr.mxu0 0.0
  %1784 = vmatpush1.msra.mxu0 0.0
  %1785 = vmatprep.subr.mxu0 0.0
  %1786 = vmatpush1.msra.mxu0 0.0
  %1787 = vmatprep.subr.mxu0 0.0
  %1788 = vmatpush1.msra.mxu0 0.0
  %1789 = vmatprep.subr.mxu0 0.0
  %1790 = vmatpush1.msra.mxu0 0.0
  %1791 = vmatprep.subr.mxu0 0.0
  %1792 = vmatpush1.msra.mxu0 0.0
  %1793 = vmatprep.subr.mxu0 0.0
  %1794 = vmatpush1.msra.mxu0 0.0
  %1795 = vmatprep.subr.mxu0 0.0
  %1796 = vmatpush1.msra.mxu0 0.0
  %1797 = vmatprep.subr.mxu0 0.0
  %1798 = vmatpush1.msra.mxu0 0.0
  %1799 = vmatprep.subr.mxu0 0.0
  %1800 = vmatpush1.msra.mxu0 0.0
  %1801 = vmatprep.subr.mxu0 0.0
  %1802 = vmatpush1.msra.mxu0 0.0
  %1803 = vmatprep.mubr.f32.mxu0 0.0
  %1804 = vmatmul.mubr.f32.gmra.mrb[0].mxu0 %v1737
  %v1805 = vpop.f32.mrb[0].mxu0
  %v1806 = vadd.f32 0.0, %v1805
  %v1807 = vpop.f32.mrb[0].mxu0
  %1808 = vdwg.mxu0
  %v1809 = vadd.f32 %v1635, %v1806
  %v1810 = vxor.u32 %v1809, 2147483648
  %v1811 = vmul.f32 %v1810, 1.442695
  %v1812 = vpow.pop %v1811
  %v1813 = vadd.f32 %v1812, 1.0
  %v1814 = vrcp.pop %v1813
  %v1815 = vmul.f32 1.0, %v1814
  %v1816 = vtanh.pop %v1809
  %v1817 = vmul.f32 %v1815, %v1556
  %1819 = vrot.lane.b32.xlu0 %v1816, 32
  %v1820 = vpop.permute.xlu0 %1819
  %v1822 = vmul.f32 %v1815, %v1820
  %1824 = vrot.lane.b32.xlu0 %v1822, 32
  %v1825 = vpop.permute.xlu0 %1824
  %v1827 = vadd.f32 %v1817, %v1825
  %v1828 = vtanh.pop %v1827
  %1830 = vrot.lane.b32.xlu0 %v1828, 32
  %v1831 = vpop.permute.xlu0 %1830
  %v1833 = vmul.f32 %v1815, %v1831
  %1835 = vrot.lane.b32.xlu0 %v1833, 64
  %v1836 = vpop.permute.xlu0 %1835
  %v1837 = vsel %vm53, %v1836, 0
  %1839 = vmatprep.subr.mxu0 0.0
  %1840 = vmatpush1.msra.mxu0 %v199
  %1841 = vmatprep.subr.mxu0 0.0
  %1842 = vmatpush1.msra.mxu0 %v200
  %1843 = vmatprep.subr.mxu0 0.0
  %1844 = vmatpush1.msra.mxu0 %v201
  %1845 = vmatprep.subr.mxu0 0.0
  %1846 = vmatpush1.msra.mxu0 %v202
  %1847 = vmatprep.subr.mxu0 0.0
  %1848 = vmatpush1.msra.mxu0 0.0
  %1849 = vmatprep.subr.mxu0 0.0
  %1850 = vmatpush1.msra.mxu0 0.0
  %1851 = vmatprep.subr.mxu0 0.0
  %1852 = vmatpush1.msra.mxu0 0.0
  %1853 = vmatprep.subr.mxu0 0.0
  %1854 = vmatpush1.msra.mxu0 0.0
  %1855 = vmatprep.subr.mxu0 0.0
  %1856 = vmatpush1.msra.mxu0 0.0
  %1857 = vmatprep.subr.mxu0 0.0
  %1858 = vmatpush1.msra.mxu0 0.0
  %1859 = vmatprep.subr.mxu0 0.0
  %1860 = vmatpush1.msra.mxu0 0.0
  %1861 = vmatprep.subr.mxu0 0.0
  %1862 = vmatpush1.msra.mxu0 0.0
  %1863 = vmatprep.subr.mxu0 0.0
  %1864 = vmatpush1.msra.mxu0 0.0
  %1865 = vmatprep.subr.mxu0 0.0
  %1866 = vmatpush1.msra.mxu0 0.0
  %1867 = vmatprep.subr.mxu0 0.0
  %1868 = vmatpush1.msra.mxu0 0.0
  %1869 = vmatprep.subr.mxu0 0.0
  %1870 = vmatpush1.msra.mxu0 0.0
  %1871 = vmatprep.subr.mxu0 0.0
  %1872 = vmatpush1.msra.mxu0 0.0
  %1873 = vmatprep.subr.mxu0 0.0
  %1874 = vmatpush1.msra.mxu0 0.0
  %1875 = vmatprep.subr.mxu0 0.0
  %1876 = vmatpush1.msra.mxu0 0.0
  %1877 = vmatprep.subr.mxu0 0.0
  %1878 = vmatpush1.msra.mxu0 0.0
  %1879 = vmatprep.subr.mxu0 0.0
  %1880 = vmatpush1.msra.mxu0 0.0
  %1881 = vmatprep.subr.mxu0 0.0
  %1882 = vmatpush1.msra.mxu0 0.0
  %1883 = vmatprep.subr.mxu0 0.0
  %1884 = vmatpush1.msra.mxu0 0.0
  %1885 = vmatprep.subr.mxu0 0.0
  %1886 = vmatpush1.msra.mxu0 0.0
  %1887 = vmatprep.subr.mxu0 0.0
  %1888 = vmatpush1.msra.mxu0 0.0
  %1889 = vmatprep.subr.mxu0 0.0
  %1890 = vmatpush1.msra.mxu0 0.0
  %1891 = vmatprep.subr.mxu0 0.0
  %1892 = vmatpush1.msra.mxu0 0.0
  %1893 = vmatprep.subr.mxu0 0.0
  %1894 = vmatpush1.msra.mxu0 0.0
  %1895 = vmatprep.subr.mxu0 0.0
  %1896 = vmatpush1.msra.mxu0 0.0
  %1897 = vmatprep.subr.mxu0 0.0
  %1898 = vmatpush1.msra.mxu0 0.0
  %1899 = vmatprep.subr.mxu0 0.0
  %1900 = vmatpush1.msra.mxu0 0.0
  %1901 = vmatprep.subr.mxu0 0.0
  %1902 = vmatpush1.msra.mxu0 0.0
  %1903 = vmatprep.mubr.f32.mxu0 0.0
  %1904 = vmatmul.mubr.f32.gmra.mrb[0].mxu0 %v1837
  %v1905 = vpop.f32.mrb[0].mxu0
  %v1906 = vadd.f32 %v208, %v1905
  %v1907 = vpop.f32.mrb[0].mxu0
  %1908 = vdwg.mxu0
  %v1909 = vld [vmem:[#allocation2 + $0x30] sm:$0xff]
  %1910 = vmatprep.subr.mxu0 0.0
  %1911 = vmatpush1.msra.mxu0 %v191
  %1912 = vmatprep.subr.mxu0 0.0
  %1913 = vmatpush1.msra.mxu0 %v192
  %1914 = vmatprep.subr.mxu0 0.0
  %1915 = vmatpush1.msra.mxu0 %v193
  %1916 = vmatprep.subr.mxu0 0.0
  %1917 = vmatpush1.msra.mxu0 %v194
  %1918 = vmatprep.subr.mxu0 0.0
  %1919 = vmatpush1.msra.mxu0 0.0
  %1920 = vmatprep.subr.mxu0 0.0
  %1921 = vmatpush1.msra.mxu0 0.0
  %1922 = vmatprep.subr.mxu0 0.0
  %1923 = vmatpush1.msra.mxu0 0.0
  %1924 = vmatprep.subr.mxu0 0.0
  %1925 = vmatpush1.msra.mxu0 0.0
  %1926 = vmatprep.subr.mxu0 0.0
  %1927 = vmatpush1.msra.mxu0 0.0
  %1928 = vmatprep.subr.mxu0 0.0
  %1929 = vmatpush1.msra.mxu0 0.0
  %1930 = vmatprep.subr.mxu0 0.0
  %1931 = vmatpush1.msra.mxu0 0.0
  %1932 = vmatprep.subr.mxu0 0.0
  %1933 = vmatpush1.msra.mxu0 0.0
  %1934 = vmatprep.subr.mxu0 0.0
  %1935 = vmatpush1.msra.mxu0 0.0
  %1936 = vmatprep.subr.mxu0 0.0
  %1937 = vmatpush1.msra.mxu0 0.0
  %1938 = vmatprep.subr.mxu0 0.0
  %1939 = vmatpush1.msra.mxu0 0.0
  %1940 = vmatprep.subr.mxu0 0.0
  %1941 = vmatpush1.msra.mxu0 0.0
  %1942 = vmatprep.subr.mxu0 0.0
  %1943 = vmatpush1.msra.mxu0 0.0
  %1944 = vmatprep.subr.mxu0 0.0
  %1945 = vmatpush1.msra.mxu0 0.0
  %1946 = vmatprep.subr.mxu0 0.0
  %1947 = vmatpush1.msra.mxu0 0.0
  %1948 = vmatprep.subr.mxu0 0.0
  %1949 = vmatpush1.msra.mxu0 0.0
  %1950 = vmatprep.subr.mxu0 0.0
  %1951 = vmatpush1.msra.mxu0 0.0
  %1952 = vmatprep.subr.mxu0 0.0
  %1953 = vmatpush1.msra.mxu0 0.0
  %1954 = vmatprep.subr.mxu0 0.0
  %1955 = vmatpush1.msra.mxu0 0.0
  %1956 = vmatprep.subr.mxu0 0.0
  %1957 = vmatpush1.msra.mxu0 0.0
  %1958 = vmatprep.subr.mxu0 0.0
  %1959 = vmatpush1.msra.mxu0 0.0
  %1960 = vmatprep.subr.mxu0 0.0
  %1961 = vmatpush1.msra.mxu0 0.0
  %1962 = vmatprep.subr.mxu0 0.0
  %1963 = vmatpush1.msra.mxu0 0.0
  %1964 = vmatprep.subr.mxu0 0.0
  %1965 = vmatpush1.msra.mxu0 0.0
  %1966 = vmatprep.subr.mxu0 0.0
  %1967 = vmatpush1.msra.mxu0 0.0
  %1968 = vmatprep.subr.mxu0 0.0
  %1969 = vmatpush1.msra.mxu0 0.0
  %1970 = vmatprep.subr.mxu0 0.0
  %1971 = vmatpush1.msra.mxu0 0.0
  %1972 = vmatprep.subr.mxu0 0.0
  %1973 = vmatpush1.msra.mxu0 0.0
  %1974 = vmatprep.mubr.f32.mxu0 0.0
  %1975 = vmatmul.mubr.f32.gmra.mrb[0].mxu0 %v1737
  %v1976 = vpop.f32.mrb[0].mxu0
  %v1977 = vadd.f32 0.0, %v1976
  %v1978 = vpop.f32.mrb[0].mxu0
  %1979 = vdwg.mxu0
  %v1980 = vadd.f32 %v1909, %v1977
  %v1981 = vxor.u32 %v1980, 2147483648
  %v1982 = vmul.f32 %v1981, 1.442695
  %v1983 = vpow.pop %v1982
  %v1984 = vadd.f32 %v1983, 1.0
  %v1985 = vrcp.pop %v1984
  %v1986 = vmul.f32 1.0, %v1985
  %v1987 = vtanh.pop %v1980
  %v1988 = vmul.f32 %v1986, %v1727
  %1990 = vrot.lane.b32.xlu0 %v1987, 32
  %v1991 = vpop.permute.xlu0 %1990
  %v1993 = vmul.f32 %v1986, %v1991
  %1995 = vrot.lane.b32.xlu0 %v1993, 32
  %v1996 = vpop.permute.xlu0 %1995
  %v1998 = vadd.f32 %v1988, %v1996
  %v1999 = vtanh.pop %v1998
  %2001 = vrot.lane.b32.xlu0 %v1999, 32
  %v2002 = vpop.permute.xlu0 %2001
  %v2004 = vmul.f32 %v1986, %v2002
  %2006 = vrot.lane.b32.xlu0 %v2004, 64
  %v2007 = vpop.permute.xlu0 %2006
  %v2008 = vsel %vm53, %v2007, 0
  %2010 = vmatprep.subr.mxu0 0.0
  %2011 = vmatpush1.msra.mxu0 %v195
  %2012 = vmatprep.subr.mxu0 0.0
  %2013 = vmatpush1.msra.mxu0 %v196
  %2014 = vmatprep.subr.mxu0 0.0
  %2015 = vmatpush1.msra.mxu0 %v197
  %2016 = vmatprep.subr.mxu0 0.0
  %2017 = vmatpush1.msra.mxu0 %v198
  %2018 = vmatprep.subr.mxu0 0.0
  %2019 = vmatpush1.msra.mxu0 0.0
  %2020 = vmatprep.subr.mxu0 0.0
  %2021 = vmatpush1.msra.mxu0 0.0
  %2022 = vmatprep.subr.mxu0 0.0
  %2023 = vmatpush1.msra.mxu0 0.0
  %2024 = vmatprep.subr.mxu0 0.0
  %2025 = vmatpush1.msra.mxu0 0.0
  %2026 = vmatprep.subr.mxu0 0.0
  %2027 = vmatpush1.msra.mxu0 0.0
  %2028 = vmatprep.subr.mxu0 0.0
  %2029 = vmatpush1.msra.mxu0 0.0
  %2030 = vmatprep.subr.mxu0 0.0
  %2031 = vmatpush1.msra.mxu0 0.0
  %2032 = vmatprep.subr.mxu0 0.0
  %2033 = vmatpush1.msra.mxu0 0.0
  %2034 = vmatprep.subr.mxu0 0.0
  %2035 = vmatpush1.msra.mxu0 0.0
  %2036 = vmatprep.subr.mxu0 0.0
  %2037 = vmatpush1.msra.mxu0 0.0
  %2038 = vmatprep.subr.mxu0 0.0
  %2039 = vmatpush1.msra.mxu0 0.0
  %2040 = vmatprep.subr.mxu0 0.0
  %2041 = vmatpush1.msra.mxu0 0.0
  %2042 = vmatprep.subr.mxu0 0.0
  %2043 = vmatpush1.msra.mxu0 0.0
  %2044 = vmatprep.subr.mxu0 0.0
  %2045 = vmatpush1.msra.mxu0 0.0
  %2046 = vmatprep.subr.mxu0 0.0
  %2047 = vmatpush1.msra.mxu0 0.0
  %2048 = vmatprep.subr.mxu0 0.0
  %2049 = vmatpush1.msra.mxu0 0.0
  %2050 = vmatprep.subr.mxu0 0.0
  %2051 = vmatpush1.msra.mxu0 0.0
  %2052 = vmatprep.subr.mxu0 0.0
  %2053 = vmatpush1.msra.mxu0 0.0
  %2054 = vmatprep.subr.mxu0 0.0
  %2055 = vmatpush1.msra.mxu0 0.0
  %2056 = vmatprep.subr.mxu0 0.0
  %2057 = vmatpush1.msra.mxu0 0.0
  %2058 = vmatprep.subr.mxu0 0.0
  %2059 = vmatpush1.msra.mxu0 0.0
  %2060 = vmatprep.subr.mxu0 0.0
  %2061 = vmatpush1.msra.mxu0 0.0
  %2062 = vmatprep.subr.mxu0 0.0
  %2063 = vmatpush1.msra.mxu0 0.0
  %2064 = vmatprep.subr.mxu0 0.0
  %2065 = vmatpush1.msra.mxu0 0.0
  %2066 = vmatprep.subr.mxu0 0.0
  %2067 = vmatpush1.msra.mxu0 0.0
  %2068 = vmatprep.subr.mxu0 0.0
  %2069 = vmatpush1.msra.mxu0 0.0
  %2070 = vmatprep.subr.mxu0 0.0
  %2071 = vmatpush1.msra.mxu0 0.0
  %2072 = vmatprep.subr.mxu0 0.0
  %2073 = vmatpush1.msra.mxu0 0.0
  %2074 = vmatprep.mubr.f32.mxu0 0.0
  %2075 = vmatmul.mubr.f32.gmra.mrb[0].mxu0 %v2008
  %v2076 = vpop.f32.mrb[0].mxu0
  %v2077 = vadd.f32 0.0, %v2076
  %v2078 = vpop.f32.mrb[0].mxu0
  %2079 = vdwg.mxu0
  %v2080 = vadd.f32 %v1906, %v2077
  %v2081 = vxor.u32 %v2080, 2147483648
  %v2082 = vmul.f32 %v2081, 1.442695
  %v2083 = vpow.pop %v2082
  %v2084 = vadd.f32 %v2083, 1.0
  %v2085 = vrcp.pop %v2084
  %v2086 = vmul.f32 1.0, %v2085
  %v2087 = vtanh.pop %v2080
  %v2088 = vmul.f32 %v2086, %v1827
  %2090 = vrot.lane.b32.xlu0 %v2087, 32
  %v2091 = vpop.permute.xlu0 %2090
  %v2093 = vmul.f32 %v2086, %v2091
  %2095 = vrot.lane.b32.xlu0 %v2093, 32
  %v2096 = vpop.permute.xlu0 %2095
  %v2098 = vadd.f32 %v2088, %v2096
  %v2099 = vtanh.pop %v2098
  %2101 = vrot.lane.b32.xlu0 %v2099, 32
  %v2102 = vpop.permute.xlu0 %2101
  %v2104 = vmul.f32 %v2086, %v2102
  %2106 = vrot.lane.b32.xlu0 %v2104, 64
  %v2107 = vpop.permute.xlu0 %2106
  %v2108 = vsel %vm53, %v2107, 0
  %2110 = vmatprep.subr.mxu0 0.0
  %2111 = vmatpush1.msra.mxu0 %v199
  %2112 = vmatprep.subr.mxu0 0.0
  %2113 = vmatpush1.msra.mxu0 %v200
  %2114 = vmatprep.subr.mxu0 0.0
  %2115 = vmatpush1.msra.mxu0 %v201
  %2116 = vmatprep.subr.mxu0 0.0
  %2117 = vmatpush1.msra.mxu0 %v202
  %2118 = vmatprep.subr.mxu0 0.0
  %2119 = vmatpush1.msra.mxu0 0.0
  %2120 = vmatprep.subr.mxu0 0.0
  %2121 = vmatpush1.msra.mxu0 0.0
  %2122 = vmatprep.subr.mxu0 0.0
  %2123 = vmatpush1.msra.mxu0 0.0
  %2124 = vmatprep.subr.mxu0 0.0
  %2125 = vmatpush1.msra.mxu0 0.0
  %2126 = vmatprep.subr.mxu0 0.0
  %2127 = vmatpush1.msra.mxu0 0.0
  %2128 = vmatprep.subr.mxu0 0.0
  %2129 = vmatpush1.msra.mxu0 0.0
  %2130 = vmatprep.subr.mxu0 0.0
  %2131 = vmatpush1.msra.mxu0 0.0
  %2132 = vmatprep.subr.mxu0 0.0
  %2133 = vmatpush1.msra.mxu0 0.0
  %2134 = vmatprep.subr.mxu0 0.0
  %2135 = vmatpush1.msra.mxu0 0.0
  %2136 = vmatprep.subr.mxu0 0.0
  %2137 = vmatpush1.msra.mxu0 0.0
  %2138 = vmatprep.subr.mxu0 0.0
  %2139 = vmatpush1.msra.mxu0 0.0
  %2140 = vmatprep.subr.mxu0 0.0
  %2141 = vmatpush1.msra.mxu0 0.0
  %2142 = vmatprep.subr.mxu0 0.0
  %2143 = vmatpush1.msra.mxu0 0.0
  %2144 = vmatprep.subr.mxu0 0.0
  %2145 = vmatpush1.msra.mxu0 0.0
  %2146 = vmatprep.subr.mxu0 0.0
  %2147 = vmatpush1.msra.mxu0 0.0
  %2148 = vmatprep.subr.mxu0 0.0
  %2149 = vmatpush1.msra.mxu0 0.0
  %2150 = vmatprep.subr.mxu0 0.0
  %2151 = vmatpush1.msra.mxu0 0.0
  %2152 = vmatprep.subr.mxu0 0.0
  %2153 = vmatpush1.msra.mxu0 0.0
  %2154 = vmatprep.subr.mxu0 0.0
  %2155 = vmatpush1.msra.mxu0 0.0
  %2156 = vmatprep.subr.mxu0 0.0
  %2157 = vmatpush1.msra.mxu0 0.0
  %2158 = vmatprep.subr.mxu0 0.0
  %2159 = vmatpush1.msra.mxu0 0.0
  %2160 = vmatprep.subr.mxu0 0.0
  %2161 = vmatpush1.msra.mxu0 0.0
  %2162 = vmatprep.subr.mxu0 0.0
  %2163 = vmatpush1.msra.mxu0 0.0
  %2164 = vmatprep.subr.mxu0 0.0
  %2165 = vmatpush1.msra.mxu0 0.0
  %2166 = vmatprep.subr.mxu0 0.0
  %2167 = vmatpush1.msra.mxu0 0.0
  %2168 = vmatprep.subr.mxu0 0.0
  %2169 = vmatpush1.msra.mxu0 0.0
  %2170 = vmatprep.subr.mxu0 0.0
  %2171 = vmatpush1.msra.mxu0 0.0
  %2172 = vmatprep.subr.mxu0 0.0
  %2173 = vmatpush1.msra.mxu0 0.0
  %2174 = vmatprep.mubr.f32.mxu0 0.0
  %2175 = vmatmul.mubr.f32.gmra.mrb[0].mxu0 %v2108
  %v2176 = vpop.f32.mrb[0].mxu0
  %v2177 = vadd.f32 %v208, %v2176
  %v2178 = vpop.f32.mrb[0].mxu0
  %2179 = vdwg.mxu0
  %v2180 = vld [vmem:[#allocation2 + $0x38] sm:$0xff]
  %2181 = vmatprep.subr.mxu0 0.0
  %2182 = vmatpush1.msra.mxu0 %v191
  %2183 = vmatprep.subr.mxu0 0.0
  %2184 = vmatpush1.msra.mxu0 %v192
  %2185 = vmatprep.subr.mxu0 0.0
  %2186 = vmatpush1.msra.mxu0 %v193
  %2187 = vmatprep.subr.mxu0 0.0
  %2188 = vmatpush1.msra.mxu0 %v194
  %2189 = vmatprep.subr.mxu0 0.0
  %2190 = vmatpush1.msra.mxu0 0.0
  %2191 = vmatprep.subr.mxu0 0.0
  %2192 = vmatpush1.msra.mxu0 0.0
  %2193 = vmatprep.subr.mxu0 0.0
  %2194 = vmatpush1.msra.mxu0 0.0
  %2195 = vmatprep.subr.mxu0 0.0
  %2196 = vmatpush1.msra.mxu0 0.0
  %2197 = vmatprep.subr.mxu0 0.0
  %2198 = vmatpush1.msra.mxu0 0.0
  %2199 = vmatprep.subr.mxu0 0.0
  %2200 = vmatpush1.msra.mxu0 0.0
  %2201 = vmatprep.subr.mxu0 0.0
  %2202 = vmatpush1.msra.mxu0 0.0
  %2203 = vmatprep.subr.mxu0 0.0
  %2204 = vmatpush1.msra.mxu0 0.0
  %2205 = vmatprep.subr.mxu0 0.0
  %2206 = vmatpush1.msra.mxu0 0.0
  %2207 = vmatprep.subr.mxu0 0.0
  %2208 = vmatpush1.msra.mxu0 0.0
  %2209 = vmatprep.subr.mxu0 0.0
  %2210 = vmatpush1.msra.mxu0 0.0
  %2211 = vmatprep.subr.mxu0 0.0
  %2212 = vmatpush1.msra.mxu0 0.0
  %2213 = vmatprep.subr.mxu0 0.0
  %2214 = vmatpush1.msra.mxu0 0.0
  %2215 = vmatprep.subr.mxu0 0.0
  %2216 = vmatpush1.msra.mxu0 0.0
  %2217 = vmatprep.subr.mxu0 0.0
  %2218 = vmatpush1.msra.mxu0 0.0
  %2219 = vmatprep.subr.mxu0 0.0
  %2220 = vmatpush1.msra.mxu0 0.0
  %2221 = vmatprep.subr.mxu0 0.0
  %2222 = vmatpush1.msra.mxu0 0.0
  %2223 = vmatprep.subr.mxu0 0.0
  %2224 = vmatpush1.msra.mxu0 0.0
  %2225 = vmatprep.subr.mxu0 0.0
  %2226 = vmatpush1.msra.mxu0 0.0
  %2227 = vmatprep.subr.mxu0 0.0
  %2228 = vmatpush1.msra.mxu0 0.0
  %2229 = vmatprep.subr.mxu0 0.0
  %2230 = vmatpush1.msra.mxu0 0.0
  %2231 = vmatprep.subr.mxu0 0.0
  %2232 = vmatpush1.msra.mxu0 0.0
  %2233 = vmatprep.subr.mxu0 0.0
  %2234 = vmatpush1.msra.mxu0 0.0
  %2235 = vmatprep.subr.mxu0 0.0
  %2236 = vmatpush1.msra.mxu0 0.0
  %2237 = vmatprep.subr.mxu0 0.0
  %2238 = vmatpush1.msra.mxu0 0.0
  %2239 = vmatprep.subr.mxu0 0.0
  %2240 = vmatpush1.msra.mxu0 0.0
  %2241 = vmatprep.subr.mxu0 0.0
  %2242 = vmatpush1.msra.mxu0 0.0
  %2243 = vmatprep.subr.mxu0 0.0
  %2244 = vmatpush1.msra.mxu0 0.0
  %2245 = vmatprep.mubr.f32.mxu0 0.0
  %2246 = vmatmul.mubr.f32.gmra.mrb[0].mxu0 %v2008
  %v2247 = vpop.f32.mrb[0].mxu0
  %v2248 = vadd.f32 0.0, %v2247
  %v2249 = vpop.f32.mrb[0].mxu0
  %2250 = vdwg.mxu0
  %v2251 = vadd.f32 %v2180, %v2248
  %v2252 = vxor.u32 %v2251, 2147483648
  %v2253 = vmul.f32 %v2252, 1.442695
  %v2254 = vpow.pop %v2253
  %v2255 = vadd.f32 %v2254, 1.0
  %v2256 = vrcp.pop %v2255
  %v2257 = vmul.f32 1.0, %v2256
  %v2258 = vtanh.pop %v2251
  %v2259 = vmul.f32 %v2257, %v1998
  %2261 = vrot.lane.b32.xlu0 %v2258, 32
  %v2262 = vpop.permute.xlu0 %2261
  %v2264 = vmul.f32 %v2257, %v2262
  %2266 = vrot.lane.b32.xlu0 %v2264, 32
  %v2267 = vpop.permute.xlu0 %2266
  %v2269 = vadd.f32 %v2259, %v2267
  %v2270 = vtanh.pop %v2269
  %2272 = vrot.lane.b32.xlu0 %v2270, 32
  %v2273 = vpop.permute.xlu0 %2272
  %v2275 = vmul.f32 %v2257, %v2273
  %2277 = vrot.lane.b32.xlu0 %v2275, 64
  %v2278 = vpop.permute.xlu0 %2277
  %v2279 = vsel %vm53, %v2278, 0
  %2281 = vmatprep.subr.mxu0 0.0
  %2282 = vmatpush1.msra.mxu0 %v195
  %2283 = vmatprep.subr.mxu0 0.0
  %2284 = vmatpush1.msra.mxu0 %v196
  %2285 = vmatprep.subr.mxu0 0.0
  %2286 = vmatpush1.msra.mxu0 %v197
  %2287 = vmatprep.subr.mxu0 0.0
  %2288 = vmatpush1.msra.mxu0 %v198
  %2289 = vmatprep.subr.mxu0 0.0
  %2290 = vmatpush1.msra.mxu0 0.0
  %2291 = vmatprep.subr.mxu0 0.0
  %2292 = vmatpush1.msra.mxu0 0.0
  %2293 = vmatprep.subr.mxu0 0.0
  %2294 = vmatpush1.msra.mxu0 0.0
  %2295 = vmatprep.subr.mxu0 0.0
  %2296 = vmatpush1.msra.mxu0 0.0
  %2297 = vmatprep.subr.mxu0 0.0
  %2298 = vmatpush1.msra.mxu0 0.0
  %2299 = vmatprep.subr.mxu0 0.0
  %2300 = vmatpush1.msra.mxu0 0.0
  %2301 = vmatprep.subr.mxu0 0.0
  %2302 = vmatpush1.msra.mxu0 0.0
  %2303 = vmatprep.subr.mxu0 0.0
  %2304 = vmatpush1.msra.mxu0 0.0
  %2305 = vmatprep.subr.mxu0 0.0
  %2306 = vmatpush1.msra.mxu0 0.0
  %2307 = vmatprep.subr.mxu0 0.0
  %2308 = vmatpush1.msra.mxu0 0.0
  %2309 = vmatprep.subr.mxu0 0.0
  %2310 = vmatpush1.msra.mxu0 0.0
  %2311 = vmatprep.subr.mxu0 0.0
  %2312 = vmatpush1.msra.mxu0 0.0
  %2313 = vmatprep.subr.mxu0 0.0
  %2314 = vmatpush1.msra.mxu0 0.0
  %2315 = vmatprep.subr.mxu0 0.0
  %2316 = vmatpush1.msra.mxu0 0.0
  %2317 = vmatprep.subr.mxu0 0.0
  %2318 = vmatpush1.msra.mxu0 0.0
  %2319 = vmatprep.subr.mxu0 0.0
  %2320 = vmatpush1.msra.mxu0 0.0
  %2321 = vmatprep.subr.mxu0 0.0
  %2322 = vmatpush1.msra.mxu0 0.0
  %2323 = vmatprep.subr.mxu0 0.0
  %2324 = vmatpush1.msra.mxu0 0.0
  %2325 = vmatprep.subr.mxu0 0.0
  %2326 = vmatpush1.msra.mxu0 0.0
  %2327 = vmatprep.subr.mxu0 0.0
  %2328 = vmatpush1.msra.mxu0 0.0
  %2329 = vmatprep.subr.mxu0 0.0
  %2330 = vmatpush1.msra.mxu0 0.0
  %2331 = vmatprep.subr.mxu0 0.0
  %2332 = vmatpush1.msra.mxu0 0.0
  %2333 = vmatprep.subr.mxu0 0.0
  %2334 = vmatpush1.msra.mxu0 0.0
  %2335 = vmatprep.subr.mxu0 0.0
  %2336 = vmatpush1.msra.mxu0 0.0
  %2337 = vmatprep.subr.mxu0 0.0
  %2338 = vmatpush1.msra.mxu0 0.0
  %2339 = vmatprep.subr.mxu0 0.0
  %2340 = vmatpush1.msra.mxu0 0.0
  %2341 = vmatprep.subr.mxu0 0.0
  %2342 = vmatpush1.msra.mxu0 0.0
  %2343 = vmatprep.subr.mxu0 0.0
  %2344 = vmatpush1.msra.mxu0 0.0
  %2345 = vmatprep.mubr.f32.mxu0 0.0
  %2346 = vmatmul.mubr.f32.gmra.mrb[0].mxu0 %v2279
  %v2347 = vpop.f32.mrb[0].mxu0
  %v2348 = vadd.f32 0.0, %v2347
  %v2349 = vpop.f32.mrb[0].mxu0
  %2350 = vdwg.mxu0
  %v2351 = vadd.f32 %v2177, %v2348
  %v2352 = vxor.u32 %v2351, 2147483648
  %v2353 = vmul.f32 %v2352, 1.442695
  %v2354 = vpow.pop %v2353
  %v2355 = vadd.f32 %v2354, 1.0
  %v2356 = vrcp.pop %v2355
  %v2357 = vmul.f32 1.0, %v2356
  %v2358 = vtanh.pop %v2351
  %v2359 = vmul.f32 %v2357, %v2098
  %2361 = vrot.lane.b32.xlu0 %v2358, 32
  %v2362 = vpop.permute.xlu0 %2361
  %v2364 = vmul.f32 %v2357, %v2362
  %2366 = vrot.lane.b32.xlu0 %v2364, 32
  %v2367 = vpop.permute.xlu0 %2366
  %v2369 = vadd.f32 %v2359, %v2367
  %v2370 = vtanh.pop %v2369
  %2372 = vrot.lane.b32.xlu0 %v2370, 32
  %v2373 = vpop.permute.xlu0 %2372
  %v2375 = vmul.f32 %v2357, %v2373
  %v2376 = vld [vmem:[%s7] sm:$0x1]
  %v2378 = vlaneseq
  %v2379 = vshrl.u32 %v2378, 7
  %v2380 = vsub.s32 0, %v2379
  %v2381 = vrot.slane %v2376, %v2380
  %2382 = vrot.lane.b32.xlu0 %v2381, 64
  %v2383 = vpop.permute.xlu0 %2382
  %v2385 = vmul.f32 %v2375, %v2383
  %2387 = vrot.lane.b32.xlu0 %v2385, 64
  %v2388 = vpop.permute.xlu0 %2387
  %v2390 = vsel %vm53, %v2388, 0.0
  %2391 = vadd.xlane.f32.xlu0 %v2390
  %v2392 = vpop.xlane.xlu0 %2391
  %v2393 = vld [vmem:[#allocation3] sm:$0x1]
  %v2395 = vlaneseq
  %v2396 = vshrl.u32 %v2395, 7
  %v2397 = vsub.s32 0, %v2396
  %v2398 = vrot.slane %v2393, %v2397
  %v2400 = vadd.f32 %v2392, %v2398
  %vm2401 = vcmask 7168
  %2402 = vst.msk [vmem:[%s9] sm:$0xff] %vm2401, %v2400
  // Predicated region
  $region38: #{lstm_forward.1} parent=0 // pred_check
    _
  $region39: #{lstm_forward.1} parent=0 // pred_check_branch
    %2404 = sbr.rel (0) target = $region41
  $region40: #{lstm_forward.1} parent=0 // pred_region
    _
  $region41: #{lstm_forward.1} parent=0 // pred_fallthru
    _
  // Predicated region
  $region42: #{lstm_forward.1} parent=0 // pred_check
    _
  $region43: #{lstm_forward.1} parent=0 // pred_check_branch
    %2406 = sbr.rel (0) target = $region45
  $region44: #{lstm_forward.1} parent=0 // pred_region
    _
  $region45: #{lstm_forward.1} parent=0 // pred_fallthru
    _

</llo_original>
